<compile_context>
chip_gen: v7x
topology: tpu7x:2x2x1
jax: 0.10.0
libtpu: 0.0.40
codegen_flags: <defaults>
</compile_context>

<pallas_src>
import functools

import numpy as np
import jax
import jax.numpy as jnp
from jax.experimental import pallas as pl
from jax.experimental.pallas import tpu as pltpu

# ---------------------------------------------------------------------------
# Config (mirrors the fields of `c` used by FTransformNet_GLOW.build_network)
# ---------------------------------------------------------------------------
Y_DIM = 16            # c.y_dim_features
N_BLOCKS = 2          # c.n_blocks
INTERNAL_WIDTH = 32   # c.internal_width
INTERNAL_LAYER = 3    # c.internal_layer  -> 3 Linear layers per subnet
CLAMP = 2.0           # c.exponent_clamping
USE_PERMUTATION = True
INIT_SCALE = 0.05     # c.init_scale
BATCH = 8

D1 = Y_DIM // 2
D2 = Y_DIM - D1
_W = INTERNAL_WIDTH
_NSLOT = N_BLOCKS * 2 * INTERNAL_LAYER          # total Linear layers
_SLAB = max(_W, 2 * Y_DIM)                      # square padded weight-slot size


# ---------------------------------------------------------------------------
# In-kernel helpers
# ---------------------------------------------------------------------------
_TAN_3PI_8 = 2.414213562373095
_TAN_PI_8 = 0.41421356237309503
_PI_2 = 1.5707963267948966
_PI_4 = 0.7853981633974483


def _atan_f32(x):
  """float32-accurate arctan (Cephes atanf reduction + poly).

  jnp.arctan lowering is not guaranteed on Mosaic, so expand with ops that
  are (abs / mul / add / where).  Divisions are done with
  pl.reciprocal(approx=True) so they land on the otherwise-idle EUP slot.
  Exactly atan(0) == 0 (needed for the pass-through rows of the folded
  permutation).  Matches torch.atan to ~1e-4 relative.
  """
  sign = jnp.where(x < 0.0, -1.0, 1.0)
  t = jnp.abs(x)
  big = t > _TAN_3PI_8
  mid = jnp.logical_and(t > _TAN_PI_8, jnp.logical_not(big))
  safe_t = jnp.where(big, t, 1.0)               # avoid 1/0 in dead lanes
  inv_t = pl.reciprocal(safe_t, approx=True)
  inv_tp1 = pl.reciprocal(t + 1.0, approx=True)
  z = jnp.where(big, -inv_t, jnp.where(mid, (t - 1.0) * inv_tp1, t))
  base = jnp.where(big, _PI_2, jnp.where(mid, _PI_4, 0.0))
  zz = z * z
  poly = ((((8.05374449538e-2 * zz - 1.38776856032e-1) * zz
            + 1.99777106478e-1) * zz - 3.33329491539e-1) * zz * z + z)
  return sign * (base + poly)


# ---------------------------------------------------------------------------
# Fused Pallas kernel: whole network in one call, transposed (D, TB) layout
# ---------------------------------------------------------------------------
def _ftransform_fused_kernel(x_ref, w_ref, b_ref, pfin_ref, z_ref, ld_ref, *,
                             n_couplings, n_layers, d, clamp, apply_final_perm):
  """x_ref:   (D, TB) f32 activations, batch on lanes, physical row order.
     w_ref:   (NSLOT, R, R) bf16 padded weight slab, (out, in) orientation,
              permutations already folded in (input gather in layer-0 columns,
              s/t output scatter in last-layer rows).
     b_ref:   (NSLOT, R, 1) f32 padded bias slab (same scatter as weights).
     pfin_ref:(D, D) f32, final physical->logical row permutation matrix.
     z_ref:   (D, TB) f32.   ld_ref: (1, TB) f32 (lane-dense log-jacobian)."""
  h = x_ref[...]                                         # (D, TB) f32
  logdet = jnp.zeros((1, h.shape[1]), jnp.float32)
  scale = clamp * 0.636
  inv_clamp = 1.0 / clamp

  for cpl in range(n_couplings):
    slot0 = cpl * n_layers
    a = h
    for l in range(n_layers):
      w = w_ref[slot0 + l]                               # (R, R) bf16
      if l == 0:
        w = w[:, :d]                                     # folded input gather
      a = jnp.dot(w, a.astype(jnp.bfloat16),
                  preferred_element_type=jnp.float32) + b_ref[slot0 + l]
      if l < n_layers - 1:
        a = jnp.maximum(a, 0.0)
    # rows 0..D-1  : s (physical row order, exact 0 on pass-through rows)
    # rows D..2D-1 : t (physical row order, exact 0 on pass-through rows)
    s = scale * _atan_f32(a[:d, :] * inv_clamp)
    t = a[d:2 * d, :]
    h = jnp.exp(s) * h + t                               # full-state update
    logdet = logdet + jnp.sum(s, axis=0, keepdims=True)

  if apply_final_perm:
    # single (D, D) matmul restoring logical channel order at the very end
    h = jnp.dot(pfin_ref[...], h, preferred_element_type=jnp.float32)

  z_ref[...] = h
  ld_ref[...] = logdet


def _round_up(a, m):
  return ((a + m - 1) // m) * m


def ftransform_glow_forward(x, w_slab, b_slab, pfin, apply_final_perm, *,
                            batch_tile=512):
  """Fused forward for the whole GraphINN.  x: (B, D).  Returns (z, log_jac_det)."""
  B, D = x.shape

  if B <= batch_tile:
    tb = B                       # full-extent block (always legal)
    b_pad = B
  else:
    tb = max(128, (batch_tile // 128) * 128)   # lane-dim multiple of 128
    b_pad = _round_up(B, tb)

  x_t = x.T                                           # (D, B) - batch on lanes
  if b_pad != B:
    x_t = jnp.pad(x_t, ((0, 0), (0, b_pad - B)))      # zero-pad; per-sample math

  grid = (b_pad // tb,)

  kernel = functools.partial(
      _ftransform_fused_kernel,
      n_couplings=N_BLOCKS * 2, n_layers=INTERNAL_LAYER,
      d=D, clamp=float(CLAMP), apply_final_perm=apply_final_perm)

  z_t, ld = pl.pallas_call(
      kernel,
      out_shape=(jax.ShapeDtypeStruct((D, b_pad), jnp.float32),
                 jax.ShapeDtypeStruct((1, b_pad), jnp.float32)),
      grid_spec=pltpu.PrefetchScalarGridSpec(
          num_scalar_prefetch=0,
          grid=grid,
          in_specs=[
              pl.BlockSpec((D, tb), lambda b: (0, b)),          # activations
              pl.BlockSpec(w_slab.shape, lambda b: (0, 0, 0)),  # resident weights
              pl.BlockSpec(b_slab.shape, lambda b: (0, 0, 0)),  # resident biases
              pl.BlockSpec(pfin.shape, lambda b: (0, 0)),       # final perm
          ],
          out_specs=(pl.BlockSpec((D, tb), lambda b: (0, b)),
                     pl.BlockSpec((1, tb), lambda b: (0, b))),
      ),
      compiler_params=pltpu.CompilerParams(
          dimension_semantics=("parallel",)),
  )(x_t, w_slab, b_slab, pfin)
  return z_t[:, :B].T, ld[0, :B]


# ---------------------------------------------------------------------------
# Parameter init + packing into VMEM slabs (permutations folded at pack time)
# ---------------------------------------------------------------------------
def _make_subnet_params(key, c_in, c_out):
  dims = [c_in] + [INTERNAL_WIDTH] * (INTERNAL_LAYER - 1) + [c_out]
  ws, bs = [], []
  for i in range(INTERNAL_LAYER):
    key, kw, kb = jax.random.split(key, 3)
    ws.append(INIT_SCALE * jax.random.normal(kw, (dims[i + 1], dims[i]), jnp.float32))
    bs.append(INIT_SCALE * jax.random.normal(kb, (dims[i + 1],), jnp.float32))
  return (ws, bs), key


def init_params(key):
  params = []
  for i in range(N_BLOCKS):
    subnet1, key = _make_subnet_params(key, D1, 2 * D2)   # subnet1: d1 -> 2*d2
    subnet2, key = _make_subnet_params(key, D2, 2 * D1)   # subnet2: d2 -> 2*d1
    # PermuteRandom(seed=i): fixed seeded channel permutation (zero log-det).
    # NOTE: matches FrEIA's np.random.seed(seed) + permutation; weights are not
    # byte-matched to torch anyway (different RNG), only semantics are mirrored.
    np.random.seed(i)
    perm = np.random.permutation(Y_DIM)
    params.append({'subnet1': subnet1, 'subnet2': subnet2, 'perm': perm})
  return params


def pack_params(params):
  """Pack all Linear layers into padded slabs with the channel permutations
  folded in (virtual-permutation scheme):

    * rho[j] = physical row holding logical channel j of the current block
      input (rho starts as identity; after each block rho = rho[perm]).
    * layer-0 weights gather their inputs from physical rows (column scatter).
    * last-layer weights scatter s rows to physical rows 0..D-1 and t rows to
      physical rows D..2D-1; rows of channels NOT updated by this coupling are
      exactly zero, so exp(0)*h + 0 passes them through untouched.
    * only the final composed permutation remains as one (D, D) matrix."""
  r = _SLAB
  d = Y_DIM
  w_slab = np.zeros((_NSLOT, r, r), np.float32)
  b_slab = np.zeros((_NSLOT, r, 1), np.float32)
  rho = np.arange(d)

  for blk, prm in enumerate(params):
    # coupling order inside a block: subnet2 (updates logical [:d1]) first,
    # then subnet1 (updates logical [d1:]) -- as in FrEIA GLOWCouplingBlock.
    plan = ((prm['subnet2'], rho[D1:].copy(), rho[:D1].copy(), D1),
            (prm['subnet1'], rho[:D1].copy(), rho[D1:].copy(), D2))
    for half, (subnet, in_phys, out_phys, n_half) in enumerate(plan):
      ws, bs = subnet
      for l in range(INTERNAL_LAYER):
        slot = (blk * 2 + half) * INTERNAL_LAYER + l
        w = np.asarray(ws[l], np.float32)        # (out, in) - torch orientation
        b = np.asarray(bs[l], np.float32)
        if l == 0:
          tmp = np.zeros((w.shape[0], r), np.float32)
          tmp[:, in_phys] = w                    # folded input gather
          w_slab[slot, :w.shape[0], :] = tmp
          b_slab[slot, :b.shape[0], 0] = b
        elif l < INTERNAL_LAYER - 1:
          w_slab[slot, :w.shape[0], :w.shape[1]] = w
          b_slab[slot, :b.shape[0], 0] = b
        else:
          tmp = np.zeros((2 * d, w.shape[1]), np.float32)
          tmp[out_phys, :] = w[:n_half, :]       # s rows -> physical rows
          tmp[d + out_phys, :] = w[n_half:, :]   # t rows -> physical rows
          w_slab[slot, :2 * d, :w.shape[1]] = tmp
          tb_ = np.zeros((2 * d,), np.float32)
          tb_[out_phys] = b[:n_half]
          tb_[d + out_phys] = b[n_half:]
          b_slab[slot, :2 * d, 0] = tb_
    if USE_PERMUTATION:
      rho = rho[np.asarray(prm['perm'])]         # compose the virtual perm

  pfin = np.zeros((d, d), np.float32)
  pfin[np.arange(d), rho] = 1.0                  # z[j] = h_phys[rho[j]]
  apply_final_perm = not np.array_equal(rho, np.arange(d))

  return (jnp.asarray(w_slab, jnp.bfloat16),     # bf16 MXU weights
          jnp.asarray(b_slab, jnp.float32),
          jnp.asarray(pfin, jnp.float32),
          apply_final_perm)


# ---------------------------------------------------------------------------
# Pure-JAX reference (for in-script correctness check)
# ---------------------------------------------------------------------------
def reference_forward(x, params):
  logdet = jnp.zeros((x.shape[0],), jnp.float32)
  for blk in params:
    x1, x2 = x[:, :D1], x[:, D1:]
    w1, b1 = blk['subnet1']
    w2, b2 = blk['subnet2']

    def mlp(h, ws, bs):
      for i in range(len(ws) - 1):
        h = jnp.maximum(h @ ws[i].T + bs[i], 0.0)
      return h @ ws[-1].T + bs[-1]

    a2 = mlp(x2, w2, b2)
    s2 = CLAMP * 0.636 * jnp.arctan(a2[:, :D1] / CLAMP); t2 = a2[:, D1:]
    y1 = jnp.exp(s2) * x1 + t2
    a1 = mlp(y1, w1, b1)
    s1 = CLAMP * 0.636 * jnp.arctan(a1[:, :D2] / CLAMP); t1 = a1[:, D2:]
    y2 = jnp.exp(s1) * x2 + t1
    logdet = logdet + jnp.sum(s2, axis=1) + jnp.sum(s1, axis=1)
    x = jnp.concatenate([y1, y2], axis=1)
    if USE_PERMUTATION:
      x = x[:, blk['perm']]
  return x, logdet


# TODO(synk): optimizer / LR-scheduler / save-load in the PyTorch module are
# training-time utilities, not part of the forward pass; not translated.

if __name__ == "__main__":
  key = jax.random.PRNGKey(0)
  kx, kp = jax.random.split(key)
  x = jax.random.normal(kx, (BATCH, Y_DIM), jnp.float32)
  params = init_params(kp)
  w_slab, b_slab, pfin, apply_final = pack_params(params)

  fwd = jax.jit(lambda xx: ftransform_glow_forward(
      xx, w_slab, b_slab, pfin, apply_final))
  z, log_jac_det = fwd(x)
  jax.block_until_ready((z, log_jac_det))

  assert z.shape == (BATCH, Y_DIM), z.shape
  assert log_jac_det.shape == (BATCH,), log_jac_det.shape
  assert bool(jnp.all(jnp.isfinite(z))) and bool(jnp.all(jnp.isfinite(log_jac_det)))

  # Structural correctness check against a pure-JAX reference (loose tolerance
  # to absorb bf16 MXU weights + approx-reciprocal atan; structural bugs are
  # O(1) errors).
  z_ref, ld_ref = reference_forward(x, params)
  np.testing.assert_allclose(np.asarray(z), np.asarray(z_ref),
                             rtol=2e-2, atol=2e-2)
  np.testing.assert_allclose(np.asarray(log_jac_det), np.asarray(ld_ref),
                             rtol=2e-2, atol=2e-2)

  print("KERNEL_OK")
</pallas_src>

<mosaic_0001>
module attributes {stable_mosaic.version = 11 : i64} {
  func.func @_ftransform_fused_kernel(%arg0: i32, %arg1: memref<16x8xf32, #tpu.memory_space<vmem>>, %arg2: memref<12x32x32xbf16, #tpu.memory_space<vmem>>, %arg3: memref<12x32x1xf32, #tpu.memory_space<vmem>>, %arg4: memref<16x16xf32, #tpu.memory_space<vmem>>, %arg5: memref<16x8xf32, #tpu.memory_space<vmem>>, %arg6: memref<1x8xf32, #tpu.memory_space<vmem>>) attributes {dimension_semantics = [#tpu.dimension_semantics<parallel>], iteration_bounds = array<i64: 1>, scalar_prefetch = 0 : i64, scratch_operands = 0 : i64, tpu.core_type = #tpu.core_type<tc>, window_params = [{transform_indices = @transform_0, window_bounds = array<i64: 16, 8>}, {pipeline_mode = #tpu.pipeline_mode<synchronous>, transform_indices = @transform_1, window_bounds = array<i64: 12, 32, 32>}, {pipeline_mode = #tpu.pipeline_mode<synchronous>, transform_indices = @transform_2, window_bounds = array<i64: 12, 32, 1>}, {pipeline_mode = #tpu.pipeline_mode<synchronous>, transform_indices = @transform_3, window_bounds = array<i64: 16, 16>}, {transform_indices = @transform_4, window_bounds = array<i64: 16, 8>}, {transform_indices = @transform_5, window_bounds = array<i64: 1, 8>}]} {
    %c0 = arith.constant 0 : index
    %c0_0 = arith.constant 0 : index
    %0 = vector.load %arg1[%c0, %c0_0] : memref<16x8xf32, #tpu.memory_space<vmem>>, vector<16x8xf32>
    %cst = arith.constant 0.000000e+00 : f32
    %1 = vector.broadcast %cst : f32 to vector<1x8xf32>
    %c0_1 = arith.constant 0 : index
    %c0_2 = arith.constant 0 : index
    %c0_3 = arith.constant 0 : index
    %2 = vector.load %arg2[%c0_1, %c0_2, %c0_3] : memref<12x32x32xbf16, #tpu.memory_space<vmem>>, vector<1x32x32xbf16>
    %3 = vector.shape_cast %2 : vector<1x32x32xbf16> to vector<32x32xbf16>
    %4 = vector.extract_strided_slice %3 {offsets = [0, 0], sizes = [32, 16], strides = [1, 1]} : vector<32x32xbf16> to vector<32x16xbf16>
    %5 = arith.truncf %0 : vector<16x8xf32> to vector<16x8xbf16>
    %cst_4 = arith.constant dense<0.000000e+00> : vector<32x8xf32>
    %6 = tpu.matmul %4, %5, %cst_4 {dimension_numbers = #tpu.dot_dimension_numbers<[1], [0], [0], [1], [0, 0, 1, 1], [], []>} : vector<32x16xbf16>, vector<16x8xbf16>, vector<32x8xf32> -> vector<32x8xf32>
    %c0_5 = arith.constant 0 : index
    %c0_6 = arith.constant 0 : index
    %c0_7 = arith.constant 0 : index
    %7 = vector.load %arg3[%c0_5, %c0_6, %c0_7] : memref<12x32x1xf32, #tpu.memory_space<vmem>>, vector<1x32x1xf32>
    %8 = vector.shape_cast %7 : vector<1x32x1xf32> to vector<32x1xf32>
    %9 = vector.broadcast %8 : vector<32x1xf32> to vector<32x8xf32>
    %10 = arith.addf %6, %9 : vector<32x8xf32>
    %cst_8 = arith.constant 0.000000e+00 : f32
    %11 = vector.broadcast %cst_8 : f32 to vector<32x8xf32>
    %12 = arith.maximumf %10, %11 : vector<32x8xf32>
    %c1 = arith.constant 1 : index
    %c0_9 = arith.constant 0 : index
    %c0_10 = arith.constant 0 : index
    %13 = vector.load %arg2[%c1, %c0_9, %c0_10] : memref<12x32x32xbf16, #tpu.memory_space<vmem>>, vector<1x32x32xbf16>
    %14 = vector.shape_cast %13 : vector<1x32x32xbf16> to vector<32x32xbf16>
    %15 = arith.truncf %12 : vector<32x8xf32> to vector<32x8xbf16>
    %cst_11 = arith.constant dense<0.000000e+00> : vector<32x8xf32>
    %16 = tpu.matmul %14, %15, %cst_11 {dimension_numbers = #tpu.dot_dimension_numbers<[1], [0], [0], [1], [0, 0, 1, 1], [], []>} : vector<32x32xbf16>, vector<32x8xbf16>, vector<32x8xf32> -> vector<32x8xf32>
    %c1_12 = arith.constant 1 : index
    %c0_13 = arith.constant 0 : index
    %c0_14 = arith.constant 0 : index
    %17 = vector.load %arg3[%c1_12, %c0_13, %c0_14] : memref<12x32x1xf32, #tpu.memory_space<vmem>>, vector<1x32x1xf32>
    %18 = vector.shape_cast %17 : vector<1x32x1xf32> to vector<32x1xf32>
    %19 = vector.broadcast %18 : vector<32x1xf32> to vector<32x8xf32>
    %20 = arith.addf %16, %19 : vector<32x8xf32>
    %cst_15 = arith.constant 0.000000e+00 : f32
    %21 = vector.broadcast %cst_15 : f32 to vector<32x8xf32>
    %22 = arith.maximumf %20, %21 : vector<32x8xf32>
    %c2 = arith.constant 2 : index
    %c0_16 = arith.constant 0 : index
    %c0_17 = arith.constant 0 : index
    %23 = vector.load %arg2[%c2, %c0_16, %c0_17] : memref<12x32x32xbf16, #tpu.memory_space<vmem>>, vector<1x32x32xbf16>
    %24 = vector.shape_cast %23 : vector<1x32x32xbf16> to vector<32x32xbf16>
    %25 = arith.truncf %22 : vector<32x8xf32> to vector<32x8xbf16>
    %cst_18 = arith.constant dense<0.000000e+00> : vector<32x8xf32>
    %26 = tpu.matmul %24, %25, %cst_18 {dimension_numbers = #tpu.dot_dimension_numbers<[1], [0], [0], [1], [0, 0, 1, 1], [], []>} : vector<32x32xbf16>, vector<32x8xbf16>, vector<32x8xf32> -> vector<32x8xf32>
    %c2_19 = arith.constant 2 : index
    %c0_20 = arith.constant 0 : index
    %c0_21 = arith.constant 0 : index
    %27 = vector.load %arg3[%c2_19, %c0_20, %c0_21] : memref<12x32x1xf32, #tpu.memory_space<vmem>>, vector<1x32x1xf32>
    %28 = vector.shape_cast %27 : vector<1x32x1xf32> to vector<32x1xf32>
    %29 = vector.broadcast %28 : vector<32x1xf32> to vector<32x8xf32>
    %30 = arith.addf %26, %29 : vector<32x8xf32>
    %31 = vector.extract_strided_slice %30 {offsets = [0, 0], sizes = [16, 8], strides = [1, 1]} : vector<32x8xf32> to vector<16x8xf32>
    %cst_22 = arith.constant 5.000000e-01 : f32
    %32 = vector.broadcast %cst_22 : f32 to vector<16x8xf32>
    %33 = arith.mulf %31, %32 : vector<16x8xf32>
    %cst_23 = arith.constant 0.000000e+00 : f32
    %34 = vector.broadcast %cst_23 : f32 to vector<16x8xf32>
    %35 = arith.cmpf olt, %33, %34 : vector<16x8xf32>
    %cst_24 = arith.constant -1.000000e+00 : f32
    %cst_25 = arith.constant 1.000000e+00 : f32
    %36 = vector.broadcast %cst_24 : f32 to vector<16x8xf32>
    %37 = vector.broadcast %cst_25 : f32 to vector<16x8xf32>
    %38 = arith.select %35, %36, %37 : vector<16x8xi1>, vector<16x8xf32>
    %39 = math.absf %33 : vector<16x8xf32>
    %cst_26 = arith.constant 2.41421366 : f32
    %40 = vector.broadcast %cst_26 : f32 to vector<16x8xf32>
    %41 = arith.cmpf ogt, %39, %40 : vector<16x8xf32>
    %cst_27 = arith.constant 0.414213568 : f32
    %42 = vector.broadcast %cst_27 : f32 to vector<16x8xf32>
    %43 = arith.cmpf ogt, %39, %42 : vector<16x8xf32>
    %cst_28 = arith.constant dense<true> : vector<16x8xi1>
    %44 = arith.xori %41, %cst_28 : vector<16x8xi1>
    %45 = arith.andi %43, %44 : vector<16x8xi1>
    %cst_29 = arith.constant 1.000000e+00 : f32
    %46 = vector.broadcast %cst_29 : f32 to vector<16x8xf32>
    %47 = arith.select %41, %39, %46 : vector<16x8xi1>, vector<16x8xf32>
    %48 = tpu.reciprocal %47 {approx = true} : vector<16x8xf32> -> vector<16x8xf32>
    %cst_30 = arith.constant 1.000000e+00 : f32
    %49 = vector.broadcast %cst_30 : f32 to vector<16x8xf32>
    %50 = arith.addf %39, %49 : vector<16x8xf32>
    %51 = tpu.reciprocal %50 {approx = true} : vector<16x8xf32> -> vector<16x8xf32>
    %cst_31 = arith.constant 0.000000e+00 : f32
    %52 = vector.broadcast %cst_31 : f32 to vector<16x8xf32>
    %53 = arith.subf %52, %48 : vector<16x8xf32>
    %cst_32 = arith.constant 1.000000e+00 : f32
    %54 = vector.broadcast %cst_32 : f32 to vector<16x8xf32>
    %55 = arith.subf %39, %54 : vector<16x8xf32>
    %56 = arith.mulf %55, %51 : vector<16x8xf32>
    %57 = arith.select %45, %56, %39 : vector<16x8xi1>, vector<16x8xf32>
    %58 = arith.select %41, %53, %57 : vector<16x8xi1>, vector<16x8xf32>
    %cst_33 = arith.constant 0.785398185 : f32
    %cst_34 = arith.constant 0.000000e+00 : f32
    %59 = vector.broadcast %cst_33 : f32 to vector<16x8xf32>
    %60 = vector.broadcast %cst_34 : f32 to vector<16x8xf32>
    %61 = arith.select %45, %59, %60 : vector<16x8xi1>, vector<16x8xf32>
    %cst_35 = arith.constant 1.57079637 : f32
    %62 = vector.broadcast %cst_35 : f32 to vector<16x8xf32>
    %63 = arith.select %41, %62, %61 : vector<16x8xi1>, vector<16x8xf32>
    %64 = arith.mulf %58, %58 : vector<16x8xf32>
    %cst_36 = arith.constant 0.0805374458 : f32
    %65 = vector.broadcast %cst_36 : f32 to vector<16x8xf32>
    %66 = arith.mulf %65, %64 : vector<16x8xf32>
    %cst_37 = arith.constant 0.138776854 : f32
    %67 = vector.broadcast %cst_37 : f32 to vector<16x8xf32>
    %68 = arith.subf %66, %67 : vector<16x8xf32>
    %69 = arith.mulf %68, %64 : vector<16x8xf32>
    %cst_38 = arith.constant 0.199777111 : f32
    %70 = vector.broadcast %cst_38 : f32 to vector<16x8xf32>
    %71 = arith.addf %69, %70 : vector<16x8xf32>
    %72 = arith.mulf %71, %64 : vector<16x8xf32>
    %cst_39 = arith.constant 0.333329499 : f32
    %73 = vector.broadcast %cst_39 : f32 to vector<16x8xf32>
    %74 = arith.subf %72, %73 : vector<16x8xf32>
    %75 = arith.mulf %74, %64 : vector<16x8xf32>
    %76 = arith.mulf %75, %58 : vector<16x8xf32>
    %77 = arith.addf %76, %58 : vector<16x8xf32>
    %78 = arith.addf %63, %77 : vector<16x8xf32>
    %79 = arith.mulf %38, %78 : vector<16x8xf32>
    %cst_40 = arith.constant 1.272000e+00 : f32
    %80 = vector.broadcast %cst_40 : f32 to vector<16x8xf32>
    %81 = arith.mulf %80, %79 : vector<16x8xf32>
    %82 = vector.extract_strided_slice %30 {offsets = [16, 0], sizes = [16, 8], strides = [1, 1]} : vector<32x8xf32> to vector<16x8xf32>
    %83 = math.exp %81 : vector<16x8xf32>
    %84 = arith.mulf %83, %0 : vector<16x8xf32>
    %85 = arith.addf %84, %82 : vector<16x8xf32>
    %cst_41 = arith.constant dense<0.000000e+00> : vector<8xf32>
    %86 = vector.multi_reduction <add>, %81, %cst_41 [0] : vector<16x8xf32> to vector<8xf32>
    %87 = vector.shape_cast %86 : vector<8xf32> to vector<1x8xf32>
    %88 = arith.addf %1, %87 : vector<1x8xf32>
    %c3 = arith.constant 3 : index
    %c0_42 = arith.constant 0 : index
    %c0_43 = arith.constant 0 : index
    %89 = vector.load %arg2[%c3, %c0_42, %c0_43] : memref<12x32x32xbf16, #tpu.memory_space<vmem>>, vector<1x32x32xbf16>
    %90 = vector.shape_cast %89 : vector<1x32x32xbf16> to vector<32x32xbf16>
    %91 = vector.extract_strided_slice %90 {offsets = [0, 0], sizes = [32, 16], strides = [1, 1]} : vector<32x32xbf16> to vector<32x16xbf16>
    %92 = arith.truncf %85 : vector<16x8xf32> to vector<16x8xbf16>
    %cst_44 = arith.constant dense<0.000000e+00> : vector<32x8xf32>
    %93 = tpu.matmul %91, %92, %cst_44 {dimension_numbers = #tpu.dot_dimension_numbers<[1], [0], [0], [1], [0, 0, 1, 1], [], []>} : vector<32x16xbf16>, vector<16x8xbf16>, vector<32x8xf32> -> vector<32x8xf32>
    %c3_45 = arith.constant 3 : index
    %c0_46 = arith.constant 0 : index
    %c0_47 = arith.constant 0 : index
    %94 = vector.load %arg3[%c3_45, %c0_46, %c0_47] : memref<12x32x1xf32, #tpu.memory_space<vmem>>, vector<1x32x1xf32>
    %95 = vector.shape_cast %94 : vector<1x32x1xf32> to vector<32x1xf32>
    %96 = vector.broadcast %95 : vector<32x1xf32> to vector<32x8xf32>
    %97 = arith.addf %93, %96 : vector<32x8xf32>
    %cst_48 = arith.constant 0.000000e+00 : f32
    %98 = vector.broadcast %cst_48 : f32 to vector<32x8xf32>
    %99 = arith.maximumf %97, %98 : vector<32x8xf32>
    %c4 = arith.constant 4 : index
    %c0_49 = arith.constant 0 : index
    %c0_50 = arith.constant 0 : index
    %100 = vector.load %arg2[%c4, %c0_49, %c0_50] : memref<12x32x32xbf16, #tpu.memory_space<vmem>>, vector<1x32x32xbf16>
    %101 = vector.shape_cast %100 : vector<1x32x32xbf16> to vector<32x32xbf16>
    %102 = arith.truncf %99 : vector<32x8xf32> to vector<32x8xbf16>
    %cst_51 = arith.constant dense<0.000000e+00> : vector<32x8xf32>
    %103 = tpu.matmul %101, %102, %cst_51 {dimension_numbers = #tpu.dot_dimension_numbers<[1], [0], [0], [1], [0, 0, 1, 1], [], []>} : vector<32x32xbf16>, vector<32x8xbf16>, vector<32x8xf32> -> vector<32x8xf32>
    %c4_52 = arith.constant 4 : index
    %c0_53 = arith.constant 0 : index
    %c0_54 = arith.constant 0 : index
    %104 = vector.load %arg3[%c4_52, %c0_53, %c0_54] : memref<12x32x1xf32, #tpu.memory_space<vmem>>, vector<1x32x1xf32>
    %105 = vector.shape_cast %104 : vector<1x32x1xf32> to vector<32x1xf32>
    %106 = vector.broadcast %105 : vector<32x1xf32> to vector<32x8xf32>
    %107 = arith.addf %103, %106 : vector<32x8xf32>
    %cst_55 = arith.constant 0.000000e+00 : f32
    %108 = vector.broadcast %cst_55 : f32 to vector<32x8xf32>
    %109 = arith.maximumf %107, %108 : vector<32x8xf32>
    %c5 = arith.constant 5 : index
    %c0_56 = arith.constant 0 : index
    %c0_57 = arith.constant 0 : index
    %110 = vector.load %arg2[%c5, %c0_56, %c0_57] : memref<12x32x32xbf16, #tpu.memory_space<vmem>>, vector<1x32x32xbf16>
    %111 = vector.shape_cast %110 : vector<1x32x32xbf16> to vector<32x32xbf16>
    %112 = arith.truncf %109 : vector<32x8xf32> to vector<32x8xbf16>
    %cst_58 = arith.constant dense<0.000000e+00> : vector<32x8xf32>
    %113 = tpu.matmul %111, %112, %cst_58 {dimension_numbers = #tpu.dot_dimension_numbers<[1], [0], [0], [1], [0, 0, 1, 1], [], []>} : vector<32x32xbf16>, vector<32x8xbf16>, vector<32x8xf32> -> vector<32x8xf32>
    %c5_59 = arith.constant 5 : index
    %c0_60 = arith.constant 0 : index
    %c0_61 = arith.constant 0 : index
    %114 = vector.load %arg3[%c5_59, %c0_60, %c0_61] : memref<12x32x1xf32, #tpu.memory_space<vmem>>, vector<1x32x1xf32>
    %115 = vector.shape_cast %114 : vector<1x32x1xf32> to vector<32x1xf32>
    %116 = vector.broadcast %115 : vector<32x1xf32> to vector<32x8xf32>
    %117 = arith.addf %113, %116 : vector<32x8xf32>
    %118 = vector.extract_strided_slice %117 {offsets = [0, 0], sizes = [16, 8], strides = [1, 1]} : vector<32x8xf32> to vector<16x8xf32>
    %cst_62 = arith.constant 5.000000e-01 : f32
    %119 = vector.broadcast %cst_62 : f32 to vector<16x8xf32>
    %120 = arith.mulf %118, %119 : vector<16x8xf32>
    %cst_63 = arith.constant 0.000000e+00 : f32
    %121 = vector.broadcast %cst_63 : f32 to vector<16x8xf32>
    %122 = arith.cmpf olt, %120, %121 : vector<16x8xf32>
    %cst_64 = arith.constant -1.000000e+00 : f32
    %cst_65 = arith.constant 1.000000e+00 : f32
    %123 = vector.broadcast %cst_64 : f32 to vector<16x8xf32>
    %124 = vector.broadcast %cst_65 : f32 to vector<16x8xf32>
    %125 = arith.select %122, %123, %124 : vector<16x8xi1>, vector<16x8xf32>
    %126 = math.absf %120 : vector<16x8xf32>
    %cst_66 = arith.constant 2.41421366 : f32
    %127 = vector.broadcast %cst_66 : f32 to vector<16x8xf32>
    %128 = arith.cmpf ogt, %126, %127 : vector<16x8xf32>
    %cst_67 = arith.constant 0.414213568 : f32
    %129 = vector.broadcast %cst_67 : f32 to vector<16x8xf32>
    %130 = arith.cmpf ogt, %126, %129 : vector<16x8xf32>
    %cst_68 = arith.constant dense<true> : vector<16x8xi1>
    %131 = arith.xori %128, %cst_68 : vector<16x8xi1>
    %132 = arith.andi %130, %131 : vector<16x8xi1>
    %cst_69 = arith.constant 1.000000e+00 : f32
    %133 = vector.broadcast %cst_69 : f32 to vector<16x8xf32>
    %134 = arith.select %128, %126, %133 : vector<16x8xi1>, vector<16x8xf32>
    %135 = tpu.reciprocal %134 {approx = true} : vector<16x8xf32> -> vector<16x8xf32>
    %cst_70 = arith.constant 1.000000e+00 : f32
    %136 = vector.broadcast %cst_70 : f32 to vector<16x8xf32>
    %137 = arith.addf %126, %136 : vector<16x8xf32>
    %138 = tpu.reciprocal %137 {approx = true} : vector<16x8xf32> -> vector<16x8xf32>
    %cst_71 = arith.constant 0.000000e+00 : f32
    %139 = vector.broadcast %cst_71 : f32 to vector<16x8xf32>
    %140 = arith.subf %139, %135 : vector<16x8xf32>
    %cst_72 = arith.constant 1.000000e+00 : f32
    %141 = vector.broadcast %cst_72 : f32 to vector<16x8xf32>
    %142 = arith.subf %126, %141 : vector<16x8xf32>
    %143 = arith.mulf %142, %138 : vector<16x8xf32>
    %144 = arith.select %132, %143, %126 : vector<16x8xi1>, vector<16x8xf32>
    %145 = arith.select %128, %140, %144 : vector<16x8xi1>, vector<16x8xf32>
    %cst_73 = arith.constant 0.785398185 : f32
    %cst_74 = arith.constant 0.000000e+00 : f32
    %146 = vector.broadcast %cst_73 : f32 to vector<16x8xf32>
    %147 = vector.broadcast %cst_74 : f32 to vector<16x8xf32>
    %148 = arith.select %132, %146, %147 : vector<16x8xi1>, vector<16x8xf32>
    %cst_75 = arith.constant 1.57079637 : f32
    %149 = vector.broadcast %cst_75 : f32 to vector<16x8xf32>
    %150 = arith.select %128, %149, %148 : vector<16x8xi1>, vector<16x8xf32>
    %151 = arith.mulf %145, %145 : vector<16x8xf32>
    %cst_76 = arith.constant 0.0805374458 : f32
    %152 = vector.broadcast %cst_76 : f32 to vector<16x8xf32>
    %153 = arith.mulf %152, %151 : vector<16x8xf32>
    %cst_77 = arith.constant 0.138776854 : f32
    %154 = vector.broadcast %cst_77 : f32 to vector<16x8xf32>
    %155 = arith.subf %153, %154 : vector<16x8xf32>
    %156 = arith.mulf %155, %151 : vector<16x8xf32>
    %cst_78 = arith.constant 0.199777111 : f32
    %157 = vector.broadcast %cst_78 : f32 to vector<16x8xf32>
    %158 = arith.addf %156, %157 : vector<16x8xf32>
    %159 = arith.mulf %158, %151 : vector<16x8xf32>
    %cst_79 = arith.constant 0.333329499 : f32
    %160 = vector.broadcast %cst_79 : f32 to vector<16x8xf32>
    %161 = arith.subf %159, %160 : vector<16x8xf32>
    %162 = arith.mulf %161, %151 : vector<16x8xf32>
    %163 = arith.mulf %162, %145 : vector<16x8xf32>
    %164 = arith.addf %163, %145 : vector<16x8xf32>
    %165 = arith.addf %150, %164 : vector<16x8xf32>
    %166 = arith.mulf %125, %165 : vector<16x8xf32>
    %cst_80 = arith.constant 1.272000e+00 : f32
    %167 = vector.broadcast %cst_80 : f32 to vector<16x8xf32>
    %168 = arith.mulf %167, %166 : vector<16x8xf32>
    %169 = vector.extract_strided_slice %117 {offsets = [16, 0], sizes = [16, 8], strides = [1, 1]} : vector<32x8xf32> to vector<16x8xf32>
    %170 = math.exp %168 : vector<16x8xf32>
    %171 = arith.mulf %170, %85 : vector<16x8xf32>
    %172 = arith.addf %171, %169 : vector<16x8xf32>
    %cst_81 = arith.constant dense<0.000000e+00> : vector<8xf32>
    %173 = vector.multi_reduction <add>, %168, %cst_81 [0] : vector<16x8xf32> to vector<8xf32>
    %174 = vector.shape_cast %173 : vector<8xf32> to vector<1x8xf32>
    %175 = arith.addf %88, %174 : vector<1x8xf32>
    %c6 = arith.constant 6 : index
    %c0_82 = arith.constant 0 : index
    %c0_83 = arith.constant 0 : index
    %176 = vector.load %arg2[%c6, %c0_82, %c0_83] : memref<12x32x32xbf16, #tpu.memory_space<vmem>>, vector<1x32x32xbf16>
    %177 = vector.shape_cast %176 : vector<1x32x32xbf16> to vector<32x32xbf16>
    %178 = vector.extract_strided_slice %177 {offsets = [0, 0], sizes = [32, 16], strides = [1, 1]} : vector<32x32xbf16> to vector<32x16xbf16>
    %179 = arith.truncf %172 : vector<16x8xf32> to vector<16x8xbf16>
    %cst_84 = arith.constant dense<0.000000e+00> : vector<32x8xf32>
    %180 = tpu.matmul %178, %179, %cst_84 {dimension_numbers = #tpu.dot_dimension_numbers<[1], [0], [0], [1], [0, 0, 1, 1], [], []>} : vector<32x16xbf16>, vector<16x8xbf16>, vector<32x8xf32> -> vector<32x8xf32>
    %c6_85 = arith.constant 6 : index
    %c0_86 = arith.constant 0 : index
    %c0_87 = arith.constant 0 : index
    %181 = vector.load %arg3[%c6_85, %c0_86, %c0_87] : memref<12x32x1xf32, #tpu.memory_space<vmem>>, vector<1x32x1xf32>
    %182 = vector.shape_cast %181 : vector<1x32x1xf32> to vector<32x1xf32>
    %183 = vector.broadcast %182 : vector<32x1xf32> to vector<32x8xf32>
    %184 = arith.addf %180, %183 : vector<32x8xf32>
    %cst_88 = arith.constant 0.000000e+00 : f32
    %185 = vector.broadcast %cst_88 : f32 to vector<32x8xf32>
    %186 = arith.maximumf %184, %185 : vector<32x8xf32>
    %c7 = arith.constant 7 : index
    %c0_89 = arith.constant 0 : index
    %c0_90 = arith.constant 0 : index
    %187 = vector.load %arg2[%c7, %c0_89, %c0_90] : memref<12x32x32xbf16, #tpu.memory_space<vmem>>, vector<1x32x32xbf16>
    %188 = vector.shape_cast %187 : vector<1x32x32xbf16> to vector<32x32xbf16>
    %189 = arith.truncf %186 : vector<32x8xf32> to vector<32x8xbf16>
    %cst_91 = arith.constant dense<0.000000e+00> : vector<32x8xf32>
    %190 = tpu.matmul %188, %189, %cst_91 {dimension_numbers = #tpu.dot_dimension_numbers<[1], [0], [0], [1], [0, 0, 1, 1], [], []>} : vector<32x32xbf16>, vector<32x8xbf16>, vector<32x8xf32> -> vector<32x8xf32>
    %c7_92 = arith.constant 7 : index
    %c0_93 = arith.constant 0 : index
    %c0_94 = arith.constant 0 : index
    %191 = vector.load %arg3[%c7_92, %c0_93, %c0_94] : memref<12x32x1xf32, #tpu.memory_space<vmem>>, vector<1x32x1xf32>
    %192 = vector.shape_cast %191 : vector<1x32x1xf32> to vector<32x1xf32>
    %193 = vector.broadcast %192 : vector<32x1xf32> to vector<32x8xf32>
    %194 = arith.addf %190, %193 : vector<32x8xf32>
    %cst_95 = arith.constant 0.000000e+00 : f32
    %195 = vector.broadcast %cst_95 : f32 to vector<32x8xf32>
    %196 = arith.maximumf %194, %195 : vector<32x8xf32>
    %c8 = arith.constant 8 : index
    %c0_96 = arith.constant 0 : index
    %c0_97 = arith.constant 0 : index
    %197 = vector.load %arg2[%c8, %c0_96, %c0_97] : memref<12x32x32xbf16, #tpu.memory_space<vmem>>, vector<1x32x32xbf16>
    %198 = vector.shape_cast %197 : vector<1x32x32xbf16> to vector<32x32xbf16>
    %199 = arith.truncf %196 : vector<32x8xf32> to vector<32x8xbf16>
    %cst_98 = arith.constant dense<0.000000e+00> : vector<32x8xf32>
    %200 = tpu.matmul %198, %199, %cst_98 {dimension_numbers = #tpu.dot_dimension_numbers<[1], [0], [0], [1], [0, 0, 1, 1], [], []>} : vector<32x32xbf16>, vector<32x8xbf16>, vector<32x8xf32> -> vector<32x8xf32>
    %c8_99 = arith.constant 8 : index
    %c0_100 = arith.constant 0 : index
    %c0_101 = arith.constant 0 : index
    %201 = vector.load %arg3[%c8_99, %c0_100, %c0_101] : memref<12x32x1xf32, #tpu.memory_space<vmem>>, vector<1x32x1xf32>
    %202 = vector.shape_cast %201 : vector<1x32x1xf32> to vector<32x1xf32>
    %203 = vector.broadcast %202 : vector<32x1xf32> to vector<32x8xf32>
    %204 = arith.addf %200, %203 : vector<32x8xf32>
    %205 = vector.extract_strided_slice %204 {offsets = [0, 0], sizes = [16, 8], strides = [1, 1]} : vector<32x8xf32> to vector<16x8xf32>
    %cst_102 = arith.constant 5.000000e-01 : f32
    %206 = vector.broadcast %cst_102 : f32 to vector<16x8xf32>
    %207 = arith.mulf %205, %206 : vector<16x8xf32>
    %cst_103 = arith.constant 0.000000e+00 : f32
    %208 = vector.broadcast %cst_103 : f32 to vector<16x8xf32>
    %209 = arith.cmpf olt, %207, %208 : vector<16x8xf32>
    %cst_104 = arith.constant -1.000000e+00 : f32
    %cst_105 = arith.constant 1.000000e+00 : f32
    %210 = vector.broadcast %cst_104 : f32 to vector<16x8xf32>
    %211 = vector.broadcast %cst_105 : f32 to vector<16x8xf32>
    %212 = arith.select %209, %210, %211 : vector<16x8xi1>, vector<16x8xf32>
    %213 = math.absf %207 : vector<16x8xf32>
    %cst_106 = arith.constant 2.41421366 : f32
    %214 = vector.broadcast %cst_106 : f32 to vector<16x8xf32>
    %215 = arith.cmpf ogt, %213, %214 : vector<16x8xf32>
    %cst_107 = arith.constant 0.414213568 : f32
    %216 = vector.broadcast %cst_107 : f32 to vector<16x8xf32>
    %217 = arith.cmpf ogt, %213, %216 : vector<16x8xf32>
    %cst_108 = arith.constant dense<true> : vector<16x8xi1>
    %218 = arith.xori %215, %cst_108 : vector<16x8xi1>
    %219 = arith.andi %217, %218 : vector<16x8xi1>
    %cst_109 = arith.constant 1.000000e+00 : f32
    %220 = vector.broadcast %cst_109 : f32 to vector<16x8xf32>
    %221 = arith.select %215, %213, %220 : vector<16x8xi1>, vector<16x8xf32>
    %222 = tpu.reciprocal %221 {approx = true} : vector<16x8xf32> -> vector<16x8xf32>
    %cst_110 = arith.constant 1.000000e+00 : f32
    %223 = vector.broadcast %cst_110 : f32 to vector<16x8xf32>
    %224 = arith.addf %213, %223 : vector<16x8xf32>
    %225 = tpu.reciprocal %224 {approx = true} : vector<16x8xf32> -> vector<16x8xf32>
    %cst_111 = arith.constant 0.000000e+00 : f32
    %226 = vector.broadcast %cst_111 : f32 to vector<16x8xf32>
    %227 = arith.subf %226, %222 : vector<16x8xf32>
    %cst_112 = arith.constant 1.000000e+00 : f32
    %228 = vector.broadcast %cst_112 : f32 to vector<16x8xf32>
    %229 = arith.subf %213, %228 : vector<16x8xf32>
    %230 = arith.mulf %229, %225 : vector<16x8xf32>
    %231 = arith.select %219, %230, %213 : vector<16x8xi1>, vector<16x8xf32>
    %232 = arith.select %215, %227, %231 : vector<16x8xi1>, vector<16x8xf32>
    %cst_113 = arith.constant 0.785398185 : f32
    %cst_114 = arith.constant 0.000000e+00 : f32
    %233 = vector.broadcast %cst_113 : f32 to vector<16x8xf32>
    %234 = vector.broadcast %cst_114 : f32 to vector<16x8xf32>
    %235 = arith.select %219, %233, %234 : vector<16x8xi1>, vector<16x8xf32>
    %cst_115 = arith.constant 1.57079637 : f32
    %236 = vector.broadcast %cst_115 : f32 to vector<16x8xf32>
    %237 = arith.select %215, %236, %235 : vector<16x8xi1>, vector<16x8xf32>
    %238 = arith.mulf %232, %232 : vector<16x8xf32>
    %cst_116 = arith.constant 0.0805374458 : f32
    %239 = vector.broadcast %cst_116 : f32 to vector<16x8xf32>
    %240 = arith.mulf %239, %238 : vector<16x8xf32>
    %cst_117 = arith.constant 0.138776854 : f32
    %241 = vector.broadcast %cst_117 : f32 to vector<16x8xf32>
    %242 = arith.subf %240, %241 : vector<16x8xf32>
    %243 = arith.mulf %242, %238 : vector<16x8xf32>
    %cst_118 = arith.constant 0.199777111 : f32
    %244 = vector.broadcast %cst_118 : f32 to vector<16x8xf32>
    %245 = arith.addf %243, %244 : vector<16x8xf32>
    %246 = arith.mulf %245, %238 : vector<16x8xf32>
    %cst_119 = arith.constant 0.333329499 : f32
    %247 = vector.broadcast %cst_119 : f32 to vector<16x8xf32>
    %248 = arith.subf %246, %247 : vector<16x8xf32>
    %249 = arith.mulf %248, %238 : vector<16x8xf32>
    %250 = arith.mulf %249, %232 : vector<16x8xf32>
    %251 = arith.addf %250, %232 : vector<16x8xf32>
    %252 = arith.addf %237, %251 : vector<16x8xf32>
    %253 = arith.mulf %212, %252 : vector<16x8xf32>
    %cst_120 = arith.constant 1.272000e+00 : f32
    %254 = vector.broadcast %cst_120 : f32 to vector<16x8xf32>
    %255 = arith.mulf %254, %253 : vector<16x8xf32>
    %256 = vector.extract_strided_slice %204 {offsets = [16, 0], sizes = [16, 8], strides = [1, 1]} : vector<32x8xf32> to vector<16x8xf32>
    %257 = math.exp %255 : vector<16x8xf32>
    %258 = arith.mulf %257, %172 : vector<16x8xf32>
    %259 = arith.addf %258, %256 : vector<16x8xf32>
    %cst_121 = arith.constant dense<0.000000e+00> : vector<8xf32>
    %260 = vector.multi_reduction <add>, %255, %cst_121 [0] : vector<16x8xf32> to vector<8xf32>
    %261 = vector.shape_cast %260 : vector<8xf32> to vector<1x8xf32>
    %262 = arith.addf %175, %261 : vector<1x8xf32>
    %c9 = arith.constant 9 : index
    %c0_122 = arith.constant 0 : index
    %c0_123 = arith.constant 0 : index
    %263 = vector.load %arg2[%c9, %c0_122, %c0_123] : memref<12x32x32xbf16, #tpu.memory_space<vmem>>, vector<1x32x32xbf16>
    %264 = vector.shape_cast %263 : vector<1x32x32xbf16> to vector<32x32xbf16>
    %265 = vector.extract_strided_slice %264 {offsets = [0, 0], sizes = [32, 16], strides = [1, 1]} : vector<32x32xbf16> to vector<32x16xbf16>
    %266 = arith.truncf %259 : vector<16x8xf32> to vector<16x8xbf16>
    %cst_124 = arith.constant dense<0.000000e+00> : vector<32x8xf32>
    %267 = tpu.matmul %265, %266, %cst_124 {dimension_numbers = #tpu.dot_dimension_numbers<[1], [0], [0], [1], [0, 0, 1, 1], [], []>} : vector<32x16xbf16>, vector<16x8xbf16>, vector<32x8xf32> -> vector<32x8xf32>
    %c9_125 = arith.constant 9 : index
    %c0_126 = arith.constant 0 : index
    %c0_127 = arith.constant 0 : index
    %268 = vector.load %arg3[%c9_125, %c0_126, %c0_127] : memref<12x32x1xf32, #tpu.memory_space<vmem>>, vector<1x32x1xf32>
    %269 = vector.shape_cast %268 : vector<1x32x1xf32> to vector<32x1xf32>
    %270 = vector.broadcast %269 : vector<32x1xf32> to vector<32x8xf32>
    %271 = arith.addf %267, %270 : vector<32x8xf32>
    %cst_128 = arith.constant 0.000000e+00 : f32
    %272 = vector.broadcast %cst_128 : f32 to vector<32x8xf32>
    %273 = arith.maximumf %271, %272 : vector<32x8xf32>
    %c10 = arith.constant 10 : index
    %c0_129 = arith.constant 0 : index
    %c0_130 = arith.constant 0 : index
    %274 = vector.load %arg2[%c10, %c0_129, %c0_130] : memref<12x32x32xbf16, #tpu.memory_space<vmem>>, vector<1x32x32xbf16>
    %275 = vector.shape_cast %274 : vector<1x32x32xbf16> to vector<32x32xbf16>
    %276 = arith.truncf %273 : vector<32x8xf32> to vector<32x8xbf16>
    %cst_131 = arith.constant dense<0.000000e+00> : vector<32x8xf32>
    %277 = tpu.matmul %275, %276, %cst_131 {dimension_numbers = #tpu.dot_dimension_numbers<[1], [0], [0], [1], [0, 0, 1, 1], [], []>} : vector<32x32xbf16>, vector<32x8xbf16>, vector<32x8xf32> -> vector<32x8xf32>
    %c10_132 = arith.constant 10 : index
    %c0_133 = arith.constant 0 : index
    %c0_134 = arith.constant 0 : index
    %278 = vector.load %arg3[%c10_132, %c0_133, %c0_134] : memref<12x32x1xf32, #tpu.memory_space<vmem>>, vector<1x32x1xf32>
    %279 = vector.shape_cast %278 : vector<1x32x1xf32> to vector<32x1xf32>
    %280 = vector.broadcast %279 : vector<32x1xf32> to vector<32x8xf32>
    %281 = arith.addf %277, %280 : vector<32x8xf32>
    %cst_135 = arith.constant 0.000000e+00 : f32
    %282 = vector.broadcast %cst_135 : f32 to vector<32x8xf32>
    %283 = arith.maximumf %281, %282 : vector<32x8xf32>
    %c11 = arith.constant 11 : index
    %c0_136 = arith.constant 0 : index
    %c0_137 = arith.constant 0 : index
    %284 = vector.load %arg2[%c11, %c0_136, %c0_137] : memref<12x32x32xbf16, #tpu.memory_space<vmem>>, vector<1x32x32xbf16>
    %285 = vector.shape_cast %284 : vector<1x32x32xbf16> to vector<32x32xbf16>
    %286 = arith.truncf %283 : vector<32x8xf32> to vector<32x8xbf16>
    %cst_138 = arith.constant dense<0.000000e+00> : vector<32x8xf32>
    %287 = tpu.matmul %285, %286, %cst_138 {dimension_numbers = #tpu.dot_dimension_numbers<[1], [0], [0], [1], [0, 0, 1, 1], [], []>} : vector<32x32xbf16>, vector<32x8xbf16>, vector<32x8xf32> -> vector<32x8xf32>
    %c11_139 = arith.constant 11 : index
    %c0_140 = arith.constant 0 : index
    %c0_141 = arith.constant 0 : index
    %288 = vector.load %arg3[%c11_139, %c0_140, %c0_141] : memref<12x32x1xf32, #tpu.memory_space<vmem>>, vector<1x32x1xf32>
    %289 = vector.shape_cast %288 : vector<1x32x1xf32> to vector<32x1xf32>
    %290 = vector.broadcast %289 : vector<32x1xf32> to vector<32x8xf32>
    %291 = arith.addf %287, %290 : vector<32x8xf32>
    %292 = vector.extract_strided_slice %291 {offsets = [0, 0], sizes = [16, 8], strides = [1, 1]} : vector<32x8xf32> to vector<16x8xf32>
    %cst_142 = arith.constant 5.000000e-01 : f32
    %293 = vector.broadcast %cst_142 : f32 to vector<16x8xf32>
    %294 = arith.mulf %292, %293 : vector<16x8xf32>
    %cst_143 = arith.constant 0.000000e+00 : f32
    %295 = vector.broadcast %cst_143 : f32 to vector<16x8xf32>
    %296 = arith.cmpf olt, %294, %295 : vector<16x8xf32>
    %cst_144 = arith.constant -1.000000e+00 : f32
    %cst_145 = arith.constant 1.000000e+00 : f32
    %297 = vector.broadcast %cst_144 : f32 to vector<16x8xf32>
    %298 = vector.broadcast %cst_145 : f32 to vector<16x8xf32>
    %299 = arith.select %296, %297, %298 : vector<16x8xi1>, vector<16x8xf32>
    %300 = math.absf %294 : vector<16x8xf32>
    %cst_146 = arith.constant 2.41421366 : f32
    %301 = vector.broadcast %cst_146 : f32 to vector<16x8xf32>
    %302 = arith.cmpf ogt, %300, %301 : vector<16x8xf32>
    %cst_147 = arith.constant 0.414213568 : f32
    %303 = vector.broadcast %cst_147 : f32 to vector<16x8xf32>
    %304 = arith.cmpf ogt, %300, %303 : vector<16x8xf32>
    %cst_148 = arith.constant dense<true> : vector<16x8xi1>
    %305 = arith.xori %302, %cst_148 : vector<16x8xi1>
    %306 = arith.andi %304, %305 : vector<16x8xi1>
    %cst_149 = arith.constant 1.000000e+00 : f32
    %307 = vector.broadcast %cst_149 : f32 to vector<16x8xf32>
    %308 = arith.select %302, %300, %307 : vector<16x8xi1>, vector<16x8xf32>
    %309 = tpu.reciprocal %308 {approx = true} : vector<16x8xf32> -> vector<16x8xf32>
    %cst_150 = arith.constant 1.000000e+00 : f32
    %310 = vector.broadcast %cst_150 : f32 to vector<16x8xf32>
    %311 = arith.addf %300, %310 : vector<16x8xf32>
    %312 = tpu.reciprocal %311 {approx = true} : vector<16x8xf32> -> vector<16x8xf32>
    %cst_151 = arith.constant 0.000000e+00 : f32
    %313 = vector.broadcast %cst_151 : f32 to vector<16x8xf32>
    %314 = arith.subf %313, %309 : vector<16x8xf32>
    %cst_152 = arith.constant 1.000000e+00 : f32
    %315 = vector.broadcast %cst_152 : f32 to vector<16x8xf32>
    %316 = arith.subf %300, %315 : vector<16x8xf32>
    %317 = arith.mulf %316, %312 : vector<16x8xf32>
    %318 = arith.select %306, %317, %300 : vector<16x8xi1>, vector<16x8xf32>
    %319 = arith.select %302, %314, %318 : vector<16x8xi1>, vector<16x8xf32>
    %cst_153 = arith.constant 0.785398185 : f32
    %cst_154 = arith.constant 0.000000e+00 : f32
    %320 = vector.broadcast %cst_153 : f32 to vector<16x8xf32>
    %321 = vector.broadcast %cst_154 : f32 to vector<16x8xf32>
    %322 = arith.select %306, %320, %321 : vector<16x8xi1>, vector<16x8xf32>
    %cst_155 = arith.constant 1.57079637 : f32
    %323 = vector.broadcast %cst_155 : f32 to vector<16x8xf32>
    %324 = arith.select %302, %323, %322 : vector<16x8xi1>, vector<16x8xf32>
    %325 = arith.mulf %319, %319 : vector<16x8xf32>
    %cst_156 = arith.constant 0.0805374458 : f32
    %326 = vector.broadcast %cst_156 : f32 to vector<16x8xf32>
    %327 = arith.mulf %326, %325 : vector<16x8xf32>
    %cst_157 = arith.constant 0.138776854 : f32
    %328 = vector.broadcast %cst_157 : f32 to vector<16x8xf32>
    %329 = arith.subf %327, %328 : vector<16x8xf32>
    %330 = arith.mulf %329, %325 : vector<16x8xf32>
    %cst_158 = arith.constant 0.199777111 : f32
    %331 = vector.broadcast %cst_158 : f32 to vector<16x8xf32>
    %332 = arith.addf %330, %331 : vector<16x8xf32>
    %333 = arith.mulf %332, %325 : vector<16x8xf32>
    %cst_159 = arith.constant 0.333329499 : f32
    %334 = vector.broadcast %cst_159 : f32 to vector<16x8xf32>
    %335 = arith.subf %333, %334 : vector<16x8xf32>
    %336 = arith.mulf %335, %325 : vector<16x8xf32>
    %337 = arith.mulf %336, %319 : vector<16x8xf32>
    %338 = arith.addf %337, %319 : vector<16x8xf32>
    %339 = arith.addf %324, %338 : vector<16x8xf32>
    %340 = arith.mulf %299, %339 : vector<16x8xf32>
    %cst_160 = arith.constant 1.272000e+00 : f32
    %341 = vector.broadcast %cst_160 : f32 to vector<16x8xf32>
    %342 = arith.mulf %341, %340 : vector<16x8xf32>
    %343 = vector.extract_strided_slice %291 {offsets = [16, 0], sizes = [16, 8], strides = [1, 1]} : vector<32x8xf32> to vector<16x8xf32>
    %344 = math.exp %342 : vector<16x8xf32>
    %345 = arith.mulf %344, %259 : vector<16x8xf32>
    %346 = arith.addf %345, %343 : vector<16x8xf32>
    %cst_161 = arith.constant dense<0.000000e+00> : vector<8xf32>
    %347 = vector.multi_reduction <add>, %342, %cst_161 [0] : vector<16x8xf32> to vector<8xf32>
    %348 = vector.shape_cast %347 : vector<8xf32> to vector<1x8xf32>
    %349 = arith.addf %262, %348 : vector<1x8xf32>
    %c0_162 = arith.constant 0 : index
    %c0_163 = arith.constant 0 : index
    %350 = vector.load %arg4[%c0_162, %c0_163] : memref<16x16xf32, #tpu.memory_space<vmem>>, vector<16x16xf32>
    %cst_164 = arith.constant dense<0.000000e+00> : vector<16x8xf32>
    %351 = tpu.matmul %350, %346, %cst_164 {dimension_numbers = #tpu.dot_dimension_numbers<[1], [0], [0], [1], [0, 0, 1, 1], [], []>} : vector<16x16xf32>, vector<16x8xf32>, vector<16x8xf32> -> vector<16x8xf32>
    %c0_165 = arith.constant 0 : index
    %c0_166 = arith.constant 0 : index
    %352 = vector.load %arg5[%c0_165, %c0_166] : memref<16x8xf32, #tpu.memory_space<vmem>>, vector<16x8xf32>
    tpu.vector_store %arg5[%c0_165, %c0_166], %351 {strides = array<i32>} : memref<16x8xf32, #tpu.memory_space<vmem>>, vector<16x8xf32>,
    %c0_167 = arith.constant 0 : index
    %c0_168 = arith.constant 0 : index
    %353 = vector.load %arg6[%c0_167, %c0_168] : memref<1x8xf32, #tpu.memory_space<vmem>>, vector<1x8xf32>
    tpu.vector_store %arg6[%c0_167, %c0_168], %349 {strides = array<i32>} : memref<1x8xf32, #tpu.memory_space<vmem>>, vector<1x8xf32>,
    return
  }
  func.func @transform_0(%arg0: i32) -> (i32, i32) {
    %c0_i32 = arith.constant 0 : i32
    %c0_i32_0 = arith.constant 0 : i32
    return %c0_i32, %arg0 : i32, i32
  }
  func.func @transform_1(%arg0: i32) -> (i32, i32, i32) {
    %c0_i32 = arith.constant 0 : i32
    %c0_i32_0 = arith.constant 0 : i32
    %c0_i32_1 = arith.constant 0 : i32
    %c0_i32_2 = arith.constant 0 : i32
    return %c0_i32, %c0_i32_0, %c0_i32_1 : i32, i32, i32
  }
  func.func @transform_2(%arg0: i32) -> (i32, i32, i32) {
    %c0_i32 = arith.constant 0 : i32
    %c0_i32_0 = arith.constant 0 : i32
    %c0_i32_1 = arith.constant 0 : i32
    %c0_i32_2 = arith.constant 0 : i32
    return %c0_i32, %c0_i32_0, %c0_i32_1 : i32, i32, i32
  }
  func.func @transform_3(%arg0: i32) -> (i32, i32) {
    %c0_i32 = arith.constant 0 : i32
    %c0_i32_0 = arith.constant 0 : i32
    %c0_i32_1 = arith.constant 0 : i32
    return %c0_i32, %c0_i32_0 : i32, i32
  }
  func.func @transform_4(%arg0: i32) -> (i32, i32) {
    %c0_i32 = arith.constant 0 : i32
    %c0_i32_0 = arith.constant 0 : i32
    return %c0_i32, %arg0 : i32, i32
  }
  func.func @transform_5(%arg0: i32) -> (i32, i32) {
    %c0_i32 = arith.constant 0 : i32
    %c0_i32_0 = arith.constant 0 : i32
    return %c0_i32, %arg0 : i32, i32
  }
}

</mosaic_0001>

<llo_original>
// kernel: _lambda_.1
$region0: #{_lambda_.1}
  #allocation0 [shape = 'u32[]', space=smem, size = 0x4, offset = 0x4, fixed_abs, tag = 'smem constant byte address 0x4 - core index']
  #allocation1 [shape = 'u32[144,128]{1,0:T(1,128)}', space=vmem, size = 0x12000, scoped, tag = 'internal scratch']
  %s0 = inlined_call_operand.vmem [shape: f32[16,8], index: 0, kind: input, shape index: {}]
  %s1 = inlined_call_operand.hbm [shape: bf16[12,32,32], index: 1, kind: input, shape index: {}]
  %s2 = inlined_call_operand.hbm [shape: f32[12,32,1], index: 2, kind: input, shape index: {}]
  %s3 = inlined_call_operand.vmem [shape: f32[16,16], index: 3, kind: input, shape index: {}]
  %s4 = inlined_call_operand.vmem [shape: f32[16,8], index: 4, kind: output, shape index: {0}]
  %s5 = inlined_call_operand.hbm [shape: f32[1,8], index: 5, kind: output, shape index: {1}]
  %6 = xla_tuple %s4, %s5
  %s7 = sld [smem:[#allocation0]]
  $region42: #{_lambda_.1} parent=0
    _
  %s9 = ssub.s32 1, %s7
  %s10 = scalar_select 0, %s9, %s7
  $region1: #{_lambda_.1} parent=0
    #allocation2 [shape = 'u8[98304]{0}', space=vmem, size = 0x18000, scoped, tag = 'input window, operand 1, single buffered']
    #allocation3 [shape = 's32[1]{0}', space=sflag, size = 0x4, scoped, tag = 'scoped memory for _lambda_.1']
    #allocation4 [shape = 's32[1]{0}', space=sflag, size = 0x4, scoped, tag = 'scoped memory for _lambda_.1']
    #allocation5 [shape = 'u8[196608]{0}', space=vmem, size = 0x30000, scoped, tag = 'input window, operand 2, single buffered']
    #allocation6 [shape = 's32[1]{0}', space=sflag, size = 0x4, scoped, tag = 'scoped memory for _lambda_.1']
    #allocation7 [shape = 'u8[512]{0}', space=vmem, size = 0x400, scoped, tag = 'output window, operand 1, single buffered']
    %11 = vsyncpa [#allocation3], 0
    %12 = vsyncpa [#allocation6], 0
    %13 = vsyncpa [#allocation4], 0
    // Predicated region
    $region2: #{_lambda_.1} parent=1 // pred_check
      _
    $region3: #{_lambda_.1} parent=1 // pred_check_branch
      %15 = sbr.rel (0) target = $region5
    $region4: #{_lambda_.1} parent=1 // pred_region
      _
    $region5: #{_lambda_.1} parent=1 // pred_fallthru
      _
    // Predicated region
    $region6: #{_lambda_.1} parent=1 // pred_check
      _
    $region7: #{_lambda_.1} parent=1 // pred_check_branch
      %17 = sbr.rel (0) target = $region9
    $region8: #{_lambda_.1} parent=1 // pred_region
      %s19 = ssub.s32 3072, 3072
      %20 = vsyncadd [#allocation3], %s19
      %s21 = sshll.u32 [#allocation2], 4
      %s22 = int_to_ptr.vmem [resolvable:$true] %s21
      %27 = dma.hbm_to_vmem [thread:$0]  %s1, 3072, %s22, [#allocation3], 64, 64, 4
    $region9: #{_lambda_.1} parent=1 // pred_fallthru
      _
    // Predicated region
    $region10: #{_lambda_.1} parent=1 // pred_check
      _
    $region11: #{_lambda_.1} parent=1 // pred_check_branch
      %29 = sbr.rel (0) target = $region13
    $region12: #{_lambda_.1} parent=1 // pred_region
      %s31 = ssub.s32 6144, 6144
      %32 = vsyncadd [#allocation6], %s31
      %s33 = sshll.u32 [#allocation5], 4
      %s34 = int_to_ptr.vmem [resolvable:$true] %s33
      %39 = dma.hbm_to_vmem [thread:$0]  %s2, 6144, %s34, [#allocation6], 128, 128, 8
    $region13: #{_lambda_.1} parent=1 // pred_fallthru
      _
    // Predicated region
    $region14: #{_lambda_.1} parent=1 // pred_check
      _
    $region15: #{_lambda_.1} parent=1 // pred_check_branch
      %41 = sbr.rel (0) target = $region17
    $region16: #{_lambda_.1} parent=1 // pred_region
      _
    $region17: #{_lambda_.1} parent=1 // pred_fallthru
      _
    // Predicated region
    $region18: #{_lambda_.1} parent=1 // pred_check
      _
    $region19: #{_lambda_.1} parent=1 // pred_check_branch
      %43 = sbr.rel (0) target = $region21
    $region20: #{_lambda_.1} parent=1 // pred_region
      %44 = dma.done [#allocation3], 3072
    $region21: #{_lambda_.1} parent=1 // pred_fallthru
      _
    // Predicated region
    $region22: #{_lambda_.1} parent=1 // pred_check
      _
    $region23: #{_lambda_.1} parent=1 // pred_check_branch
      %46 = sbr.rel (0) target = $region25
    $region24: #{_lambda_.1} parent=1 // pred_region
      %47 = dma.done [#allocation6], 6144
    $region25: #{_lambda_.1} parent=1 // pred_fallthru
      _
    %v49 = vld [vmem:[%s0] sm:$0xff]
    %v50 = vld [vmem:[%s0 + $0x8] sm:$0xff]
    %v51 = vld [vmem:[#allocation2] sm:$0xf]
    %v52 = vld [vmem:[#allocation2 + $0x4] sm:$0xf]
    %v53 = vld [vmem:[#allocation2 + $0x8] sm:$0xf]
    %v54 = vld [vmem:[#allocation2 + $0xc] sm:$0xf]
    %v55 = vpack.c.bf16 %v50, %v49
    %v56 = vld [vmem:[#allocation5] sm:$0xff]
    %v57 = vld [vmem:[#allocation5 + $0x8] sm:$0xff]
    %v58 = vld [vmem:[#allocation5 + $0x10] sm:$0xff]
    %v59 = vld [vmem:[#allocation5 + $0x18] sm:$0xff]
    %61 = vset.pattern.permute.xlu0 0
    %62 = vperm.xlu0 %61, %v56
    %v63 = vpop.permute.xlu0 %62
    %66 = vset.pattern.permute.xlu0 0
    %67 = vperm.xlu0 %66, %v57
    %v68 = vpop.permute.xlu0 %67
    %71 = vset.pattern.permute.xlu0 0
    %72 = vperm.xlu0 %71, %v58
    %v73 = vpop.permute.xlu0 %72
    %76 = vset.pattern.permute.xlu0 0
    %77 = vperm.xlu0 %76, %v59
    %v78 = vpop.permute.xlu0 %77
    %v84 = vunpack.c.l.b16 %v51
    %v85 = vunpack.c.l.b16 %v52
    %v86 = vunpack.c.l.b16 %v53
    %v87 = vunpack.c.l.b16 %v54
    %v88 = vpack.c.b16 %v85, %v84
    %v89 = vpack.c.b16 %v87, %v86
    %vm90 = vcmask 130048
    %v92 = vsel %vm90, %v88, 0
    %v95 = vsel %vm90, %v89, 0
    %97 = vmatprep.subr.bf16.mxu0 0
    %98 = vmatpush1.bf16.msra.mxu0 %v55
    %99 = vmatprep.subr.bf16.mxu0 0
    %100 = vmatpush1.bf16.msra.mxu0 0
    %101 = vmatprep.subr.bf16.mxu0 0
    %102 = vmatpush1.bf16.msra.mxu0 0
    %103 = vmatprep.subr.bf16.mxu0 0
    %104 = vmatpush1.bf16.msra.mxu0 0
    %105 = vmatprep.subr.bf16.mxu0 0
    %106 = vmatpush1.bf16.msra.mxu0 0
    %107 = vmatprep.subr.bf16.mxu0 0
    %108 = vmatpush1.bf16.msra.mxu0 0
    %109 = vmatprep.subr.bf16.mxu0 0
    %110 = vmatpush1.bf16.msra.mxu0 0
    %111 = vmatprep.subr.bf16.mxu0 0
    %112 = vmatpush1.bf16.msra.mxu0 0
    %113 = vmatprep.subr.bf16.mxu0 0
    %114 = vmatpush1.bf16.msra.mxu0 0
    %115 = vmatprep.subr.bf16.mxu0 0
    %116 = vmatpush1.bf16.msra.mxu0 0
    %117 = vmatprep.subr.bf16.mxu0 0
    %118 = vmatpush1.bf16.msra.mxu0 0
    %119 = vmatprep.subr.bf16.mxu0 0
    %120 = vmatpush1.bf16.msra.mxu0 0
    %121 = vmatprep.subr.bf16.mxu0 0
    %122 = vmatpush1.bf16.msra.mxu0 0
    %123 = vmatprep.subr.bf16.mxu0 0
    %124 = vmatpush1.bf16.msra.mxu0 0
    %125 = vmatprep.subr.bf16.mxu0 0
    %126 = vmatpush1.bf16.msra.mxu0 0
    %127 = vmatprep.subr.bf16.mxu0 0
    %128 = vmatpush1.bf16.msra.mxu0 0
    %129 = vmatprep.mubr.bf16.mxu0 0
    %130 = vmatmul.mubr.bf16.gmra.mrb[0].mxu0 %v92
    %v131 = vpop.f32.mrb[0].mxu0
    %v132 = vadd.f32 %v63, %v131
    %v133 = vpop.f32.mrb[0].mxu0
    %v134 = vpop.f32.mrb[0].mxu0
    %v135 = vadd.f32 %v68, %v134
    %v136 = vpop.f32.mrb[0].mxu0
    %137 = vmatprep.mubr.bf16.mxu0 0
    %138 = vmatmul.mubr.bf16.gmra.mrb[0].mxu0 %v95
    %v139 = vpop.f32.mrb[0].mxu0
    %v140 = vadd.f32 %v73, %v139
    %v141 = vpop.f32.mrb[0].mxu0
    %v142 = vpop.f32.mrb[0].mxu0
    %v143 = vadd.f32 %v78, %v142
    %v144 = vpop.f32.mrb[0].mxu0
    %145 = vdwg.mxu0
    %v146 = vmax.f32 %v132, 0.0
    %v147 = vmax.f32 %v135, 0.0
    %v148 = vmax.f32 %v140, 0.0
    %v149 = vmax.f32 %v143, 0.0
    %s150 = scalar_lea.vmem [#allocation2], 16
    %v151 = vld [vmem:[%s150] sm:$0xf]
    %v152 = vld [vmem:[%s150 + $0x4] sm:$0xf]
    %v153 = vld [vmem:[%s150 + $0x8] sm:$0xf]
    %v154 = vld [vmem:[%s150 + $0xc] sm:$0xf]
    %v155 = vpack.c.bf16 %v147, %v146
    %v156 = vpack.c.bf16 %v149, %v148
    %s157 = scalar_lea.vmem [#allocation5], 32
    %v158 = vld [vmem:[%s157] sm:$0xff]
    %v159 = vld [vmem:[%s157 + $0x8] sm:$0xff]
    %v160 = vld [vmem:[%s157 + $0x10] sm:$0xff]
    %v161 = vld [vmem:[%s157 + $0x18] sm:$0xff]
    %163 = vset.pattern.permute.xlu0 0
    %164 = vperm.xlu0 %163, %v158
    %v165 = vpop.permute.xlu0 %164
    %168 = vset.pattern.permute.xlu0 0
    %169 = vperm.xlu0 %168, %v159
    %v170 = vpop.permute.xlu0 %169
    %173 = vset.pattern.permute.xlu0 0
    %174 = vperm.xlu0 %173, %v160
    %v175 = vpop.permute.xlu0 %174
    %178 = vset.pattern.permute.xlu0 0
    %179 = vperm.xlu0 %178, %v161
    %v180 = vpop.permute.xlu0 %179
    %v186 = vunpack.c.l.b16 %v151
    %v187 = vunpack.c.l.b16 %v152
    %v188 = vunpack.c.l.b16 %v153
    %v189 = vunpack.c.l.b16 %v154
    %v190 = vpack.c.b16 %v187, %v186
    %v191 = vpack.c.b16 %v189, %v188
    %vm192 = vcmask 261120
    %v194 = vsel %vm192, %v190, 0
    %v197 = vsel %vm192, %v191, 0
    %199 = vmatprep.subr.bf16.mxu0 0
    %200 = vmatpush1.bf16.msra.mxu0 %v155
    %201 = vmatprep.subr.bf16.mxu0 0
    %202 = vmatpush1.bf16.msra.mxu0 %v156
    %203 = vmatprep.subr.bf16.mxu0 0
    %204 = vmatpush1.bf16.msra.mxu0 0
    %205 = vmatprep.subr.bf16.mxu0 0
    %206 = vmatpush1.bf16.msra.mxu0 0
    %207 = vmatprep.subr.bf16.mxu0 0
    %208 = vmatpush1.bf16.msra.mxu0 0
    %209 = vmatprep.subr.bf16.mxu0 0
    %210 = vmatpush1.bf16.msra.mxu0 0
    %211 = vmatprep.subr.bf16.mxu0 0
    %212 = vmatpush1.bf16.msra.mxu0 0
    %213 = vmatprep.subr.bf16.mxu0 0
    %214 = vmatpush1.bf16.msra.mxu0 0
    %215 = vmatprep.subr.bf16.mxu0 0
    %216 = vmatpush1.bf16.msra.mxu0 0
    %217 = vmatprep.subr.bf16.mxu0 0
    %218 = vmatpush1.bf16.msra.mxu0 0
    %219 = vmatprep.subr.bf16.mxu0 0
    %220 = vmatpush1.bf16.msra.mxu0 0
    %221 = vmatprep.subr.bf16.mxu0 0
    %222 = vmatpush1.bf16.msra.mxu0 0
    %223 = vmatprep.subr.bf16.mxu0 0
    %224 = vmatpush1.bf16.msra.mxu0 0
    %225 = vmatprep.subr.bf16.mxu0 0
    %226 = vmatpush1.bf16.msra.mxu0 0
    %227 = vmatprep.subr.bf16.mxu0 0
    %228 = vmatpush1.bf16.msra.mxu0 0
    %229 = vmatprep.subr.bf16.mxu0 0
    %230 = vmatpush1.bf16.msra.mxu0 0
    %231 = vmatprep.mubr.bf16.mxu0 0
    %232 = vmatmul.mubr.bf16.gmra.mrb[0].mxu0 %v194
    %v233 = vpop.f32.mrb[0].mxu0
    %v234 = vadd.f32 %v165, %v233
    %v235 = vpop.f32.mrb[0].mxu0
    %v236 = vpop.f32.mrb[0].mxu0
    %v237 = vadd.f32 %v170, %v236
    %v238 = vpop.f32.mrb[0].mxu0
    %239 = vmatprep.mubr.bf16.mxu0 0
    %240 = vmatmul.mubr.bf16.gmra.mrb[0].mxu0 %v197
    %v241 = vpop.f32.mrb[0].mxu0
    %v242 = vadd.f32 %v175, %v241
    %v243 = vpop.f32.mrb[0].mxu0
    %v244 = vpop.f32.mrb[0].mxu0
    %v245 = vadd.f32 %v180, %v244
    %v246 = vpop.f32.mrb[0].mxu0
    %247 = vdwg.mxu0
    %v248 = vmax.f32 %v234, 0.0
    %v249 = vmax.f32 %v237, 0.0
    %v250 = vmax.f32 %v242, 0.0
    %v251 = vmax.f32 %v245, 0.0
    %s252 = scalar_lea.vmem [#allocation2], 32
    %v253 = vld [vmem:[%s252] sm:$0xf]
    %v254 = vld [vmem:[%s252 + $0x4] sm:$0xf]
    %v255 = vld [vmem:[%s252 + $0x8] sm:$0xf]
    %v256 = vld [vmem:[%s252 + $0xc] sm:$0xf]
    %v257 = vpack.c.bf16 %v249, %v248
    %v258 = vpack.c.bf16 %v251, %v250
    %s259 = scalar_lea.vmem [#allocation5], 64
    %v260 = vld [vmem:[%s259] sm:$0xff]
    %v261 = vld [vmem:[%s259 + $0x8] sm:$0xff]
    %v262 = vld [vmem:[%s259 + $0x10] sm:$0xff]
    %v263 = vld [vmem:[%s259 + $0x18] sm:$0xff]
    %265 = vset.pattern.permute.xlu0 0
    %266 = vperm.xlu0 %265, %v260
    %v267 = vpop.permute.xlu0 %266
    %270 = vset.pattern.permute.xlu0 0
    %271 = vperm.xlu0 %270, %v261
    %v272 = vpop.permute.xlu0 %271
    %275 = vset.pattern.permute.xlu0 0
    %276 = vperm.xlu0 %275, %v262
    %v277 = vpop.permute.xlu0 %276
    %280 = vset.pattern.permute.xlu0 0
    %281 = vperm.xlu0 %280, %v263
    %v282 = vpop.permute.xlu0 %281
    %v288 = vunpack.c.l.b16 %v253
    %v289 = vunpack.c.l.b16 %v254
    %v290 = vunpack.c.l.b16 %v255
    %v291 = vunpack.c.l.b16 %v256
    %v292 = vpack.c.b16 %v289, %v288
    %v293 = vpack.c.b16 %v291, %v290
    %v295 = vsel %vm192, %v292, 0
    %v298 = vsel %vm192, %v293, 0
    %300 = vmatprep.subr.bf16.mxu0 0
    %301 = vmatpush1.bf16.msra.mxu0 %v257
    %302 = vmatprep.subr.bf16.mxu0 0
    %303 = vmatpush1.bf16.msra.mxu0 %v258
    %304 = vmatprep.subr.bf16.mxu0 0
    %305 = vmatpush1.bf16.msra.mxu0 0
    %306 = vmatprep.subr.bf16.mxu0 0
    %307 = vmatpush1.bf16.msra.mxu0 0
    %308 = vmatprep.subr.bf16.mxu0 0
    %309 = vmatpush1.bf16.msra.mxu0 0
    %310 = vmatprep.subr.bf16.mxu0 0
    %311 = vmatpush1.bf16.msra.mxu0 0
    %312 = vmatprep.subr.bf16.mxu0 0
    %313 = vmatpush1.bf16.msra.mxu0 0
    %314 = vmatprep.subr.bf16.mxu0 0
    %315 = vmatpush1.bf16.msra.mxu0 0
    %316 = vmatprep.subr.bf16.mxu0 0
    %317 = vmatpush1.bf16.msra.mxu0 0
    %318 = vmatprep.subr.bf16.mxu0 0
    %319 = vmatpush1.bf16.msra.mxu0 0
    %320 = vmatprep.subr.bf16.mxu0 0
    %321 = vmatpush1.bf16.msra.mxu0 0
    %322 = vmatprep.subr.bf16.mxu0 0
    %323 = vmatpush1.bf16.msra.mxu0 0
    %324 = vmatprep.subr.bf16.mxu0 0
    %325 = vmatpush1.bf16.msra.mxu0 0
    %326 = vmatprep.subr.bf16.mxu0 0
    %327 = vmatpush1.bf16.msra.mxu0 0
    %328 = vmatprep.subr.bf16.mxu0 0
    %329 = vmatpush1.bf16.msra.mxu0 0
    %330 = vmatprep.subr.bf16.mxu0 0
    %331 = vmatpush1.bf16.msra.mxu0 0
    %332 = vmatprep.mubr.bf16.mxu0 0
    %333 = vmatmul.mubr.bf16.gmra.mrb[0].mxu0 %v295
    %v334 = vpop.f32.mrb[0].mxu0
    %v335 = vadd.f32 %v267, %v334
    %v336 = vpop.f32.mrb[0].mxu0
    %v337 = vpop.f32.mrb[0].mxu0
    %v338 = vadd.f32 %v272, %v337
    %v339 = vpop.f32.mrb[0].mxu0
    %340 = vmatprep.mubr.bf16.mxu0 0
    %341 = vmatmul.mubr.bf16.gmra.mrb[0].mxu0 %v298
    %v342 = vpop.f32.mrb[0].mxu0
    %v343 = vadd.f32 %v277, %v342
    %v344 = vpop.f32.mrb[0].mxu0
    %v345 = vpop.f32.mrb[0].mxu0
    %v346 = vadd.f32 %v282, %v345
    %v347 = vpop.f32.mrb[0].mxu0
    %348 = vdwg.mxu0
    %v349 = vmul.f32 %v335, 0.5
    %v350 = vmul.f32 %v338, 0.5
    %vm351 = vcmp.lt.f32.partialorder %v349, 0.0
    %vm352 = vcmp.lt.f32.partialorder %v350, 0.0
    %v353 = vsel %vm351, -1.0, 1.0
    %v354 = vsel %vm352, -1.0, 1.0
    %v355 = vand.u32 2147483647, %v349
    %v356 = vand.u32 2147483647, %v350
    %vm357 = vcmp.gt.f32.partialorder %v355, 2.4142137
    %vm358 = vcmp.gt.f32.partialorder %v356, 2.4142137
    %vm359 = vcmp.gt.f32.partialorder %v355, 0.41421357
    %vm360 = vcmp.gt.f32.partialorder %v356, 0.41421357
    %vm361 = vmxor %vm357, 1
    %vm362 = vmxor %vm358, 1
    %vm363 = vmand %vm359, %vm361
    %vm364 = vmand %vm360, %vm362
    %v365 = vsel %vm357, %v355, 1.0
    %v366 = vsel %vm358, %v356, 1.0
    %v367 = vrcp.pop %v365
    %v368 = vrcp.pop %v366
    %v369 = vadd.f32 %v355, 1.0
    %v370 = vadd.f32 %v356, 1.0
    %v371 = vrcp.pop %v369
    %v372 = vrcp.pop %v370
    %v373 = vsub.f32 0.0, %v367
    %v374 = vsub.f32 0.0, %v368
    %v375 = vsub.f32 %v355, 1.0
    %v376 = vsub.f32 %v356, 1.0
    %v377 = vmul.f32 %v375, %v371
    %v378 = vmul.f32 %v376, %v372
    %v379 = vsel %vm363, %v377, %v355
    %v380 = vsel %vm364, %v378, %v356
    %v381 = vsel %vm357, %v373, %v379
    %v382 = vsel %vm358, %v374, %v380
    %v383 = vsel %vm363, 0.7853982, 0.0
    %v384 = vsel %vm364, 0.7853982, 0.0
    %v385 = vsel %vm357, 1.5707964, %v383
    %v386 = vsel %vm358, 1.5707964, %v384
    %v387 = vmul.f32 %v381, %v381
    %v388 = vmul.f32 %v382, %v382
    %v389 = vmul.f32 %v387, 0.080537446
    %v390 = vmul.f32 %v388, 0.080537446
    %v391 = vsub.f32 %v389, 0.13877685
    %v392 = vsub.f32 %v390, 0.13877685
    %v393 = vmul.f32 %v391, %v387
    %v394 = vmul.f32 %v392, %v388
    %v395 = vadd.f32 %v393, 0.19977711
    %v396 = vadd.f32 %v394, 0.19977711
    %v397 = vmul.f32 %v395, %v387
    %v398 = vmul.f32 %v396, %v388
    %v399 = vsub.f32 %v397, 0.3333295
    %v400 = vsub.f32 %v398, 0.3333295
    %v401 = vmul.f32 %v399, %v387
    %v402 = vmul.f32 %v400, %v388
    %v403 = vmul.f32 %v401, %v381
    %v404 = vmul.f32 %v402, %v382
    %v405 = vadd.f32 %v403, %v381
    %v406 = vadd.f32 %v404, %v382
    %v407 = vadd.f32 %v385, %v405
    %v408 = vadd.f32 %v386, %v406
    %v409 = vmul.f32 %v353, %v407
    %v410 = vmul.f32 %v354, %v408
    %v411 = vmul.f32 %v409, 1.272
    %v412 = vmul.f32 %v410, 1.272
    %v413 = vmul.f32 %v411, 1.442695
    %v414 = vpow.pop %v413
    %v415 = vmul.f32 %v412, 1.442695
    %v416 = vpow.pop %v415
    %v417 = vmul.f32 %v414, %v49
    %v418 = vmul.f32 %v416, %v50
    %v419 = vadd.f32 %v417, %v343
    %v420 = vadd.f32 %v418, %v346
    %vm421 = vcmask 64512
    %v422 = vsel %vm421, %v411, 0.0
    %v423 = vsel %vm421, %v412, 0.0
    %v424 = vadd.f32 %v422, %v423
    %v425 = vrot.slane %v424, 4
    %v426 = vadd.f32 %v424, %v425
    %v427 = vrot.slane %v426, 2
    %v428 = vadd.f32 %v426, %v427
    %v429 = vrot.slane %v428, 1
    %v430 = vadd.f32 %v428, %v429
    %v431 = vadd.f32 %v430, 0.0
    %s432 = scalar_lea.vmem [#allocation2], 48
    %v433 = vld [vmem:[%s432] sm:$0xf]
    %v434 = vld [vmem:[%s432 + $0x4] sm:$0xf]
    %v435 = vld [vmem:[%s432 + $0x8] sm:$0xf]
    %v436 = vld [vmem:[%s432 + $0xc] sm:$0xf]
    %v437 = vpack.c.bf16 %v420, %v419
    %s438 = scalar_lea.vmem [#allocation5], 96
    %v439 = vld [vmem:[%s438] sm:$0xff]
    %v440 = vld [vmem:[%s438 + $0x8] sm:$0xff]
    %v441 = vld [vmem:[%s438 + $0x10] sm:$0xff]
    %v442 = vld [vmem:[%s438 + $0x18] sm:$0xff]
    %444 = vset.pattern.permute.xlu0 0
    %445 = vperm.xlu0 %444, %v439
    %v446 = vpop.permute.xlu0 %445
    %449 = vset.pattern.permute.xlu0 0
    %450 = vperm.xlu0 %449, %v440
    %v451 = vpop.permute.xlu0 %450
    %454 = vset.pattern.permute.xlu0 0
    %455 = vperm.xlu0 %454, %v441
    %v456 = vpop.permute.xlu0 %455
    %459 = vset.pattern.permute.xlu0 0
    %460 = vperm.xlu0 %459, %v442
    %v461 = vpop.permute.xlu0 %460
    %v467 = vunpack.c.l.b16 %v433
    %v468 = vunpack.c.l.b16 %v434
    %v469 = vunpack.c.l.b16 %v435
    %v470 = vunpack.c.l.b16 %v436
    %v471 = vpack.c.b16 %v468, %v467
    %v472 = vpack.c.b16 %v470, %v469
    %v474 = vsel %vm90, %v471, 0
    %v477 = vsel %vm90, %v472, 0
    %479 = vmatprep.subr.bf16.mxu0 0
    %480 = vmatpush1.bf16.msra.mxu0 %v437
    %481 = vmatprep.subr.bf16.mxu0 0
    %482 = vmatpush1.bf16.msra.mxu0 0
    %483 = vmatprep.subr.bf16.mxu0 0
    %484 = vmatpush1.bf16.msra.mxu0 0
    %485 = vmatprep.subr.bf16.mxu0 0
    %486 = vmatpush1.bf16.msra.mxu0 0
    %487 = vmatprep.subr.bf16.mxu0 0
    %488 = vmatpush1.bf16.msra.mxu0 0
    %489 = vmatprep.subr.bf16.mxu0 0
    %490 = vmatpush1.bf16.msra.mxu0 0
    %491 = vmatprep.subr.bf16.mxu0 0
    %492 = vmatpush1.bf16.msra.mxu0 0
    %493 = vmatprep.subr.bf16.mxu0 0
    %494 = vmatpush1.bf16.msra.mxu0 0
    %495 = vmatprep.subr.bf16.mxu0 0
    %496 = vmatpush1.bf16.msra.mxu0 0
    %497 = vmatprep.subr.bf16.mxu0 0
    %498 = vmatpush1.bf16.msra.mxu0 0
    %499 = vmatprep.subr.bf16.mxu0 0
    %500 = vmatpush1.bf16.msra.mxu0 0
    %501 = vmatprep.subr.bf16.mxu0 0
    %502 = vmatpush1.bf16.msra.mxu0 0
    %503 = vmatprep.subr.bf16.mxu0 0
    %504 = vmatpush1.bf16.msra.mxu0 0
    %505 = vmatprep.subr.bf16.mxu0 0
    %506 = vmatpush1.bf16.msra.mxu0 0
    %507 = vmatprep.subr.bf16.mxu0 0
    %508 = vmatpush1.bf16.msra.mxu0 0
    %509 = vmatprep.subr.bf16.mxu0 0
    %510 = vmatpush1.bf16.msra.mxu0 0
    %511 = vmatprep.mubr.bf16.mxu0 0
    %512 = vmatmul.mubr.bf16.gmra.mrb[0].mxu0 %v474
    %v513 = vpop.f32.mrb[0].mxu0
    %v514 = vadd.f32 %v446, %v513
    %v515 = vpop.f32.mrb[0].mxu0
    %v516 = vpop.f32.mrb[0].mxu0
    %v517 = vadd.f32 %v451, %v516
    %v518 = vpop.f32.mrb[0].mxu0
    %519 = vmatprep.mubr.bf16.mxu0 0
    %520 = vmatmul.mubr.bf16.gmra.mrb[0].mxu0 %v477
    %v521 = vpop.f32.mrb[0].mxu0
    %v522 = vadd.f32 %v456, %v521
    %v523 = vpop.f32.mrb[0].mxu0
    %v524 = vpop.f32.mrb[0].mxu0
    %v525 = vadd.f32 %v461, %v524
    %v526 = vpop.f32.mrb[0].mxu0
    %527 = vdwg.mxu0
    %v528 = vmax.f32 %v514, 0.0
    %v529 = vmax.f32 %v517, 0.0
    %v530 = vmax.f32 %v522, 0.0
    %v531 = vmax.f32 %v525, 0.0
    %s532 = scalar_lea.vmem [#allocation2], 64
    %v533 = vld [vmem:[%s532] sm:$0xf]
    %v534 = vld [vmem:[%s532 + $0x4] sm:$0xf]
    %v535 = vld [vmem:[%s532 + $0x8] sm:$0xf]
    %v536 = vld [vmem:[%s532 + $0xc] sm:$0xf]
    %v537 = vpack.c.bf16 %v529, %v528
    %v538 = vpack.c.bf16 %v531, %v530
    %s539 = scalar_lea.vmem [#allocation5], 128
    %v540 = vld [vmem:[%s539] sm:$0xff]
    %v541 = vld [vmem:[%s539 + $0x8] sm:$0xff]
    %v542 = vld [vmem:[%s539 + $0x10] sm:$0xff]
    %v543 = vld [vmem:[%s539 + $0x18] sm:$0xff]
    %545 = vset.pattern.permute.xlu0 0
    %546 = vperm.xlu0 %545, %v540
    %v547 = vpop.permute.xlu0 %546
    %550 = vset.pattern.permute.xlu0 0
    %551 = vperm.xlu0 %550, %v541
    %v552 = vpop.permute.xlu0 %551
    %555 = vset.pattern.permute.xlu0 0
    %556 = vperm.xlu0 %555, %v542
    %v557 = vpop.permute.xlu0 %556
    %560 = vset.pattern.permute.xlu0 0
    %561 = vperm.xlu0 %560, %v543
    %v562 = vpop.permute.xlu0 %561
    %v568 = vunpack.c.l.b16 %v533
    %v569 = vunpack.c.l.b16 %v534
    %v570 = vunpack.c.l.b16 %v535
    %v571 = vunpack.c.l.b16 %v536
    %v572 = vpack.c.b16 %v569, %v568
    %v573 = vpack.c.b16 %v571, %v570
    %v575 = vsel %vm192, %v572, 0
    %v578 = vsel %vm192, %v573, 0
    %580 = vmatprep.subr.bf16.mxu0 0
    %581 = vmatpush1.bf16.msra.mxu0 %v537
    %582 = vmatprep.subr.bf16.mxu0 0
    %583 = vmatpush1.bf16.msra.mxu0 %v538
    %584 = vmatprep.subr.bf16.mxu0 0
    %585 = vmatpush1.bf16.msra.mxu0 0
    %586 = vmatprep.subr.bf16.mxu0 0
    %587 = vmatpush1.bf16.msra.mxu0 0
    %588 = vmatprep.subr.bf16.mxu0 0
    %589 = vmatpush1.bf16.msra.mxu0 0
    %590 = vmatprep.subr.bf16.mxu0 0
    %591 = vmatpush1.bf16.msra.mxu0 0
    %592 = vmatprep.subr.bf16.mxu0 0
    %593 = vmatpush1.bf16.msra.mxu0 0
    %594 = vmatprep.subr.bf16.mxu0 0
    %595 = vmatpush1.bf16.msra.mxu0 0
    %596 = vmatprep.subr.bf16.mxu0 0
    %597 = vmatpush1.bf16.msra.mxu0 0
    %598 = vmatprep.subr.bf16.mxu0 0
    %599 = vmatpush1.bf16.msra.mxu0 0
    %600 = vmatprep.subr.bf16.mxu0 0
    %601 = vmatpush1.bf16.msra.mxu0 0
    %602 = vmatprep.subr.bf16.mxu0 0
    %603 = vmatpush1.bf16.msra.mxu0 0
    %604 = vmatprep.subr.bf16.mxu0 0
    %605 = vmatpush1.bf16.msra.mxu0 0
    %606 = vmatprep.subr.bf16.mxu0 0
    %607 = vmatpush1.bf16.msra.mxu0 0
    %608 = vmatprep.subr.bf16.mxu0 0
    %609 = vmatpush1.bf16.msra.mxu0 0
    %610 = vmatprep.subr.bf16.mxu0 0
    %611 = vmatpush1.bf16.msra.mxu0 0
    %612 = vmatprep.mubr.bf16.mxu0 0
    %613 = vmatmul.mubr.bf16.gmra.mrb[0].mxu0 %v575
    %v614 = vpop.f32.mrb[0].mxu0
    %v615 = vadd.f32 %v547, %v614
    %v616 = vpop.f32.mrb[0].mxu0
    %v617 = vpop.f32.mrb[0].mxu0
    %v618 = vadd.f32 %v552, %v617
    %v619 = vpop.f32.mrb[0].mxu0
    %620 = vmatprep.mubr.bf16.mxu0 0
    %621 = vmatmul.mubr.bf16.gmra.mrb[0].mxu0 %v578
    %v622 = vpop.f32.mrb[0].mxu0
    %v623 = vadd.f32 %v557, %v622
    %v624 = vpop.f32.mrb[0].mxu0
    %v625 = vpop.f32.mrb[0].mxu0
    %v626 = vadd.f32 %v562, %v625
    %v627 = vpop.f32.mrb[0].mxu0
    %628 = vdwg.mxu0
    %v629 = vmax.f32 %v615, 0.0
    %v630 = vmax.f32 %v618, 0.0
    %v631 = vmax.f32 %v623, 0.0
    %v632 = vmax.f32 %v626, 0.0
    %s633 = scalar_lea.vmem [#allocation2], 80
    %v634 = vld [vmem:[%s633] sm:$0xf]
    %v635 = vld [vmem:[%s633 + $0x4] sm:$0xf]
    %v636 = vld [vmem:[%s633 + $0x8] sm:$0xf]
    %v637 = vld [vmem:[%s633 + $0xc] sm:$0xf]
    %v638 = vpack.c.bf16 %v630, %v629
    %v639 = vpack.c.bf16 %v632, %v631
    %s640 = scalar_lea.vmem [#allocation5], 160
    %v641 = vld [vmem:[%s640] sm:$0xff]
    %v642 = vld [vmem:[%s640 + $0x8] sm:$0xff]
    %v643 = vld [vmem:[%s640 + $0x10] sm:$0xff]
    %v644 = vld [vmem:[%s640 + $0x18] sm:$0xff]
    %646 = vset.pattern.permute.xlu0 0
    %647 = vperm.xlu0 %646, %v641
    %v648 = vpop.permute.xlu0 %647
    %651 = vset.pattern.permute.xlu0 0
    %652 = vperm.xlu0 %651, %v642
    %v653 = vpop.permute.xlu0 %652
    %656 = vset.pattern.permute.xlu0 0
    %657 = vperm.xlu0 %656, %v643
    %v658 = vpop.permute.xlu0 %657
    %661 = vset.pattern.permute.xlu0 0
    %662 = vperm.xlu0 %661, %v644
    %v663 = vpop.permute.xlu0 %662
    %v669 = vunpack.c.l.b16 %v634
    %v670 = vunpack.c.l.b16 %v635
    %v671 = vunpack.c.l.b16 %v636
    %v672 = vunpack.c.l.b16 %v637
    %v673 = vpack.c.b16 %v670, %v669
    %v674 = vpack.c.b16 %v672, %v671
    %v676 = vsel %vm192, %v673, 0
    %v679 = vsel %vm192, %v674, 0
    %681 = vmatprep.subr.bf16.mxu0 0
    %682 = vmatpush1.bf16.msra.mxu0 %v638
    %683 = vmatprep.subr.bf16.mxu0 0
    %684 = vmatpush1.bf16.msra.mxu0 %v639
    %685 = vmatprep.subr.bf16.mxu0 0
    %686 = vmatpush1.bf16.msra.mxu0 0
    %687 = vmatprep.subr.bf16.mxu0 0
    %688 = vmatpush1.bf16.msra.mxu0 0
    %689 = vmatprep.subr.bf16.mxu0 0
    %690 = vmatpush1.bf16.msra.mxu0 0
    %691 = vmatprep.subr.bf16.mxu0 0
    %692 = vmatpush1.bf16.msra.mxu0 0
    %693 = vmatprep.subr.bf16.mxu0 0
    %694 = vmatpush1.bf16.msra.mxu0 0
    %695 = vmatprep.subr.bf16.mxu0 0
    %696 = vmatpush1.bf16.msra.mxu0 0
    %697 = vmatprep.subr.bf16.mxu0 0
    %698 = vmatpush1.bf16.msra.mxu0 0
    %699 = vmatprep.subr.bf16.mxu0 0
    %700 = vmatpush1.bf16.msra.mxu0 0
    %701 = vmatprep.subr.bf16.mxu0 0
    %702 = vmatpush1.bf16.msra.mxu0 0
    %703 = vmatprep.subr.bf16.mxu0 0
    %704 = vmatpush1.bf16.msra.mxu0 0
    %705 = vmatprep.subr.bf16.mxu0 0
    %706 = vmatpush1.bf16.msra.mxu0 0
    %707 = vmatprep.subr.bf16.mxu0 0
    %708 = vmatpush1.bf16.msra.mxu0 0
    %709 = vmatprep.subr.bf16.mxu0 0
    %710 = vmatpush1.bf16.msra.mxu0 0
    %711 = vmatprep.subr.bf16.mxu0 0
    %712 = vmatpush1.bf16.msra.mxu0 0
    %713 = vmatprep.mubr.bf16.mxu0 0
    %714 = vmatmul.mubr.bf16.gmra.mrb[0].mxu0 %v676
    %v715 = vpop.f32.mrb[0].mxu0
    %v716 = vadd.f32 %v648, %v715
    %v717 = vpop.f32.mrb[0].mxu0
    %v718 = vpop.f32.mrb[0].mxu0
    %v719 = vadd.f32 %v653, %v718
    %v720 = vpop.f32.mrb[0].mxu0
    %721 = vmatprep.mubr.bf16.mxu0 0
    %722 = vmatmul.mubr.bf16.gmra.mrb[0].mxu0 %v679
    %v723 = vpop.f32.mrb[0].mxu0
    %v724 = vadd.f32 %v658, %v723
    %v725 = vpop.f32.mrb[0].mxu0
    %v726 = vpop.f32.mrb[0].mxu0
    %v727 = vadd.f32 %v663, %v726
    %v728 = vpop.f32.mrb[0].mxu0
    %729 = vdwg.mxu0
    %v730 = vmul.f32 %v716, 0.5
    %v731 = vmul.f32 %v719, 0.5
    %vm732 = vcmp.lt.f32.partialorder %v730, 0.0
    %vm733 = vcmp.lt.f32.partialorder %v731, 0.0
    %v734 = vsel %vm732, -1.0, 1.0
    %v735 = vsel %vm733, -1.0, 1.0
    %v736 = vand.u32 2147483647, %v730
    %v737 = vand.u32 2147483647, %v731
    %vm738 = vcmp.gt.f32.partialorder %v736, 2.4142137
    %vm739 = vcmp.gt.f32.partialorder %v737, 2.4142137
    %vm740 = vcmp.gt.f32.partialorder %v736, 0.41421357
    %vm741 = vcmp.gt.f32.partialorder %v737, 0.41421357
    %vm742 = vmxor %vm738, 1
    %vm743 = vmxor %vm739, 1
    %vm744 = vmand %vm740, %vm742
    %vm745 = vmand %vm741, %vm743
    %v746 = vsel %vm738, %v736, 1.0
    %v747 = vsel %vm739, %v737, 1.0
    %v748 = vrcp.pop %v746
    %v749 = vrcp.pop %v747
    %v750 = vadd.f32 %v736, 1.0
    %v751 = vadd.f32 %v737, 1.0
    %v752 = vrcp.pop %v750
    %v753 = vrcp.pop %v751
    %v754 = vsub.f32 0.0, %v748
    %v755 = vsub.f32 0.0, %v749
    %v756 = vsub.f32 %v736, 1.0
    %v757 = vsub.f32 %v737, 1.0
    %v758 = vmul.f32 %v756, %v752
    %v759 = vmul.f32 %v757, %v753
    %v760 = vsel %vm744, %v758, %v736
    %v761 = vsel %vm745, %v759, %v737
    %v762 = vsel %vm738, %v754, %v760
    %v763 = vsel %vm739, %v755, %v761
    %v764 = vsel %vm744, 0.7853982, 0.0
    %v765 = vsel %vm745, 0.7853982, 0.0
    %v766 = vsel %vm738, 1.5707964, %v764
    %v767 = vsel %vm739, 1.5707964, %v765
    %v768 = vmul.f32 %v762, %v762
    %v769 = vmul.f32 %v763, %v763
    %v770 = vmul.f32 %v768, 0.080537446
    %v771 = vmul.f32 %v769, 0.080537446
    %v772 = vsub.f32 %v770, 0.13877685
    %v773 = vsub.f32 %v771, 0.13877685
    %v774 = vmul.f32 %v772, %v768
    %v775 = vmul.f32 %v773, %v769
    %v776 = vadd.f32 %v774, 0.19977711
    %v777 = vadd.f32 %v775, 0.19977711
    %v778 = vmul.f32 %v776, %v768
    %v779 = vmul.f32 %v777, %v769
    %v780 = vsub.f32 %v778, 0.3333295
    %v781 = vsub.f32 %v779, 0.3333295
    %v782 = vmul.f32 %v780, %v768
    %v783 = vmul.f32 %v781, %v769
    %v784 = vmul.f32 %v782, %v762
    %v785 = vmul.f32 %v783, %v763
    %v786 = vadd.f32 %v784, %v762
    %v787 = vadd.f32 %v785, %v763
    %v788 = vadd.f32 %v766, %v786
    %v789 = vadd.f32 %v767, %v787
    %v790 = vmul.f32 %v734, %v788
    %v791 = vmul.f32 %v735, %v789
    %v792 = vmul.f32 %v790, 1.272
    %v793 = vmul.f32 %v791, 1.272
    %v794 = vmul.f32 %v792, 1.442695
    %v795 = vpow.pop %v794
    %v796 = vmul.f32 %v793, 1.442695
    %v797 = vpow.pop %v796
    %v798 = vmul.f32 %v795, %v419
    %v799 = vmul.f32 %v797, %v420
    %v800 = vadd.f32 %v798, %v724
    %v801 = vadd.f32 %v799, %v727
    %v802 = vsel %vm421, %v792, 0.0
    %v803 = vsel %vm421, %v793, 0.0
    %v804 = vadd.f32 %v802, %v803
    %v805 = vrot.slane %v804, 4
    %v806 = vadd.f32 %v804, %v805
    %v807 = vrot.slane %v806, 2
    %v808 = vadd.f32 %v806, %v807
    %v809 = vrot.slane %v808, 1
    %v810 = vadd.f32 %v808, %v809
    %v811 = vadd.f32 %v431, %v810
    %s812 = scalar_lea.vmem [#allocation2], 96
    %v813 = vld [vmem:[%s812] sm:$0xf]
    %v814 = vld [vmem:[%s812 + $0x4] sm:$0xf]
    %v815 = vld [vmem:[%s812 + $0x8] sm:$0xf]
    %v816 = vld [vmem:[%s812 + $0xc] sm:$0xf]
    %v817 = vpack.c.bf16 %v801, %v800
    %s818 = scalar_lea.vmem [#allocation5], 192
    %v819 = vld [vmem:[%s818] sm:$0xff]
    %v820 = vld [vmem:[%s818 + $0x8] sm:$0xff]
    %v821 = vld [vmem:[%s818 + $0x10] sm:$0xff]
    %v822 = vld [vmem:[%s818 + $0x18] sm:$0xff]
    %824 = vset.pattern.permute.xlu0 0
    %825 = vperm.xlu0 %824, %v819
    %v826 = vpop.permute.xlu0 %825
    %829 = vset.pattern.permute.xlu0 0
    %830 = vperm.xlu0 %829, %v820
    %v831 = vpop.permute.xlu0 %830
    %834 = vset.pattern.permute.xlu0 0
    %835 = vperm.xlu0 %834, %v821
    %v836 = vpop.permute.xlu0 %835
    %839 = vset.pattern.permute.xlu0 0
    %840 = vperm.xlu0 %839, %v822
    %v841 = vpop.permute.xlu0 %840
    %v847 = vunpack.c.l.b16 %v813
    %v848 = vunpack.c.l.b16 %v814
    %v849 = vunpack.c.l.b16 %v815
    %v850 = vunpack.c.l.b16 %v816
    %v851 = vpack.c.b16 %v848, %v847
    %v852 = vpack.c.b16 %v850, %v849
    %v854 = vsel %vm90, %v851, 0
    %v857 = vsel %vm90, %v852, 0
    %859 = vmatprep.subr.bf16.mxu0 0
    %860 = vmatpush1.bf16.msra.mxu0 %v817
    %861 = vmatprep.subr.bf16.mxu0 0
    %862 = vmatpush1.bf16.msra.mxu0 0
    %863 = vmatprep.subr.bf16.mxu0 0
    %864 = vmatpush1.bf16.msra.mxu0 0
    %865 = vmatprep.subr.bf16.mxu0 0
    %866 = vmatpush1.bf16.msra.mxu0 0
    %867 = vmatprep.subr.bf16.mxu0 0
    %868 = vmatpush1.bf16.msra.mxu0 0
    %869 = vmatprep.subr.bf16.mxu0 0
    %870 = vmatpush1.bf16.msra.mxu0 0
    %871 = vmatprep.subr.bf16.mxu0 0
    %872 = vmatpush1.bf16.msra.mxu0 0
    %873 = vmatprep.subr.bf16.mxu0 0
    %874 = vmatpush1.bf16.msra.mxu0 0
    %875 = vmatprep.subr.bf16.mxu0 0
    %876 = vmatpush1.bf16.msra.mxu0 0
    %877 = vmatprep.subr.bf16.mxu0 0
    %878 = vmatpush1.bf16.msra.mxu0 0
    %879 = vmatprep.subr.bf16.mxu0 0
    %880 = vmatpush1.bf16.msra.mxu0 0
    %881 = vmatprep.subr.bf16.mxu0 0
    %882 = vmatpush1.bf16.msra.mxu0 0
    %883 = vmatprep.subr.bf16.mxu0 0
    %884 = vmatpush1.bf16.msra.mxu0 0
    %885 = vmatprep.subr.bf16.mxu0 0
    %886 = vmatpush1.bf16.msra.mxu0 0
    %887 = vmatprep.subr.bf16.mxu0 0
    %888 = vmatpush1.bf16.msra.mxu0 0
    %889 = vmatprep.subr.bf16.mxu0 0
    %890 = vmatpush1.bf16.msra.mxu0 0
    %891 = vmatprep.mubr.bf16.mxu0 0
    %892 = vmatmul.mubr.bf16.gmra.mrb[0].mxu0 %v854
    %v893 = vpop.f32.mrb[0].mxu0
    %v894 = vadd.f32 %v826, %v893
    %v895 = vpop.f32.mrb[0].mxu0
    %v896 = vpop.f32.mrb[0].mxu0
    %v897 = vadd.f32 %v831, %v896
    %v898 = vpop.f32.mrb[0].mxu0
    %899 = vmatprep.mubr.bf16.mxu0 0
    %900 = vmatmul.mubr.bf16.gmra.mrb[0].mxu0 %v857
    %v901 = vpop.f32.mrb[0].mxu0
    %v902 = vadd.f32 %v836, %v901
    %v903 = vpop.f32.mrb[0].mxu0
    %v904 = vpop.f32.mrb[0].mxu0
    %v905 = vadd.f32 %v841, %v904
    %v906 = vpop.f32.mrb[0].mxu0
    %907 = vdwg.mxu0
    %v908 = vmax.f32 %v894, 0.0
    %v909 = vmax.f32 %v897, 0.0
    %v910 = vmax.f32 %v902, 0.0
    %v911 = vmax.f32 %v905, 0.0
    %s912 = scalar_lea.vmem [#allocation2], 112
    %v913 = vld [vmem:[%s912] sm:$0xf]
    %v914 = vld [vmem:[%s912 + $0x4] sm:$0xf]
    %v915 = vld [vmem:[%s912 + $0x8] sm:$0xf]
    %v916 = vld [vmem:[%s912 + $0xc] sm:$0xf]
    %v917 = vpack.c.bf16 %v909, %v908
    %v918 = vpack.c.bf16 %v911, %v910
    %s919 = scalar_lea.vmem [#allocation5], 224
    %v920 = vld [vmem:[%s919] sm:$0xff]
    %v921 = vld [vmem:[%s919 + $0x8] sm:$0xff]
    %v922 = vld [vmem:[%s919 + $0x10] sm:$0xff]
    %v923 = vld [vmem:[%s919 + $0x18] sm:$0xff]
    %925 = vset.pattern.permute.xlu0 0
    %926 = vperm.xlu0 %925, %v920
    %v927 = vpop.permute.xlu0 %926
    %930 = vset.pattern.permute.xlu0 0
    %931 = vperm.xlu0 %930, %v921
    %v932 = vpop.permute.xlu0 %931
    %935 = vset.pattern.permute.xlu0 0
    %936 = vperm.xlu0 %935, %v922
    %v937 = vpop.permute.xlu0 %936
    %940 = vset.pattern.permute.xlu0 0
    %941 = vperm.xlu0 %940, %v923
    %v942 = vpop.permute.xlu0 %941
    %v948 = vunpack.c.l.b16 %v913
    %v949 = vunpack.c.l.b16 %v914
    %v950 = vunpack.c.l.b16 %v915
    %v951 = vunpack.c.l.b16 %v916
    %v952 = vpack.c.b16 %v949, %v948
    %v953 = vpack.c.b16 %v951, %v950
    %v955 = vsel %vm192, %v952, 0
    %v958 = vsel %vm192, %v953, 0
    %960 = vmatprep.subr.bf16.mxu0 0
    %961 = vmatpush1.bf16.msra.mxu0 %v917
    %962 = vmatprep.subr.bf16.mxu0 0
    %963 = vmatpush1.bf16.msra.mxu0 %v918
    %964 = vmatprep.subr.bf16.mxu0 0
    %965 = vmatpush1.bf16.msra.mxu0 0
    %966 = vmatprep.subr.bf16.mxu0 0
    %967 = vmatpush1.bf16.msra.mxu0 0
    %968 = vmatprep.subr.bf16.mxu0 0
    %969 = vmatpush1.bf16.msra.mxu0 0
    %970 = vmatprep.subr.bf16.mxu0 0
    %971 = vmatpush1.bf16.msra.mxu0 0
    %972 = vmatprep.subr.bf16.mxu0 0
    %973 = vmatpush1.bf16.msra.mxu0 0
    %974 = vmatprep.subr.bf16.mxu0 0
    %975 = vmatpush1.bf16.msra.mxu0 0
    %976 = vmatprep.subr.bf16.mxu0 0
    %977 = vmatpush1.bf16.msra.mxu0 0
    %978 = vmatprep.subr.bf16.mxu0 0
    %979 = vmatpush1.bf16.msra.mxu0 0
    %980 = vmatprep.subr.bf16.mxu0 0
    %981 = vmatpush1.bf16.msra.mxu0 0
    %982 = vmatprep.subr.bf16.mxu0 0
    %983 = vmatpush1.bf16.msra.mxu0 0
    %984 = vmatprep.subr.bf16.mxu0 0
    %985 = vmatpush1.bf16.msra.mxu0 0
    %986 = vmatprep.subr.bf16.mxu0 0
    %987 = vmatpush1.bf16.msra.mxu0 0
    %988 = vmatprep.subr.bf16.mxu0 0
    %989 = vmatpush1.bf16.msra.mxu0 0
    %990 = vmatprep.subr.bf16.mxu0 0
    %991 = vmatpush1.bf16.msra.mxu0 0
    %992 = vmatprep.mubr.bf16.mxu0 0
    %993 = vmatmul.mubr.bf16.gmra.mrb[0].mxu0 %v955
    %v994 = vpop.f32.mrb[0].mxu0
    %v995 = vadd.f32 %v927, %v994
    %v996 = vpop.f32.mrb[0].mxu0
    %v997 = vpop.f32.mrb[0].mxu0
    %v998 = vadd.f32 %v932, %v997
    %v999 = vpop.f32.mrb[0].mxu0
    %1000 = vmatprep.mubr.bf16.mxu0 0
    %1001 = vmatmul.mubr.bf16.gmra.mrb[0].mxu0 %v958
    %v1002 = vpop.f32.mrb[0].mxu0
    %v1003 = vadd.f32 %v937, %v1002
    %v1004 = vpop.f32.mrb[0].mxu0
    %v1005 = vpop.f32.mrb[0].mxu0
    %v1006 = vadd.f32 %v942, %v1005
    %v1007 = vpop.f32.mrb[0].mxu0
    %1008 = vdwg.mxu0
    %v1009 = vmax.f32 %v995, 0.0
    %v1010 = vmax.f32 %v998, 0.0
    %v1011 = vmax.f32 %v1003, 0.0
    %v1012 = vmax.f32 %v1006, 0.0
    %s1013 = scalar_lea.vmem [#allocation2], 128
    %v1014 = vld [vmem:[%s1013] sm:$0xf]
    %v1015 = vld [vmem:[%s1013 + $0x4] sm:$0xf]
    %v1016 = vld [vmem:[%s1013 + $0x8] sm:$0xf]
    %v1017 = vld [vmem:[%s1013 + $0xc] sm:$0xf]
    %v1018 = vpack.c.bf16 %v1010, %v1009
    %v1019 = vpack.c.bf16 %v1012, %v1011
    %s1020 = scalar_lea.vmem [#allocation5], 256
    %v1021 = vld [vmem:[%s1020] sm:$0xff]
    %v1022 = vld [vmem:[%s1020 + $0x8] sm:$0xff]
    %v1023 = vld [vmem:[%s1020 + $0x10] sm:$0xff]
    %v1024 = vld [vmem:[%s1020 + $0x18] sm:$0xff]
    %1026 = vset.pattern.permute.xlu0 0
    %1027 = vperm.xlu0 %1026, %v1021
    %v1028 = vpop.permute.xlu0 %1027
    %1031 = vset.pattern.permute.xlu0 0
    %1032 = vperm.xlu0 %1031, %v1022
    %v1033 = vpop.permute.xlu0 %1032
    %1036 = vset.pattern.permute.xlu0 0
    %1037 = vperm.xlu0 %1036, %v1023
    %v1038 = vpop.permute.xlu0 %1037
    %1041 = vset.pattern.permute.xlu0 0
    %1042 = vperm.xlu0 %1041, %v1024
    %v1043 = vpop.permute.xlu0 %1042
    %v1049 = vunpack.c.l.b16 %v1014
    %v1050 = vunpack.c.l.b16 %v1015
    %v1051 = vunpack.c.l.b16 %v1016
    %v1052 = vunpack.c.l.b16 %v1017
    %v1053 = vpack.c.b16 %v1050, %v1049
    %v1054 = vpack.c.b16 %v1052, %v1051
    %v1056 = vsel %vm192, %v1053, 0
    %v1059 = vsel %vm192, %v1054, 0
    %1061 = vmatprep.subr.bf16.mxu0 0
    %1062 = vmatpush1.bf16.msra.mxu0 %v1018
    %1063 = vmatprep.subr.bf16.mxu0 0
    %1064 = vmatpush1.bf16.msra.mxu0 %v1019
    %1065 = vmatprep.subr.bf16.mxu0 0
    %1066 = vmatpush1.bf16.msra.mxu0 0
    %1067 = vmatprep.subr.bf16.mxu0 0
    %1068 = vmatpush1.bf16.msra.mxu0 0
    %1069 = vmatprep.subr.bf16.mxu0 0
    %1070 = vmatpush1.bf16.msra.mxu0 0
    %1071 = vmatprep.subr.bf16.mxu0 0
    %1072 = vmatpush1.bf16.msra.mxu0 0
    %1073 = vmatprep.subr.bf16.mxu0 0
    %1074 = vmatpush1.bf16.msra.mxu0 0
    %1075 = vmatprep.subr.bf16.mxu0 0
    %1076 = vmatpush1.bf16.msra.mxu0 0
    %1077 = vmatprep.subr.bf16.mxu0 0
    %1078 = vmatpush1.bf16.msra.mxu0 0
    %1079 = vmatprep.subr.bf16.mxu0 0
    %1080 = vmatpush1.bf16.msra.mxu0 0
    %1081 = vmatprep.subr.bf16.mxu0 0
    %1082 = vmatpush1.bf16.msra.mxu0 0
    %1083 = vmatprep.subr.bf16.mxu0 0
    %1084 = vmatpush1.bf16.msra.mxu0 0
    %1085 = vmatprep.subr.bf16.mxu0 0
    %1086 = vmatpush1.bf16.msra.mxu0 0
    %1087 = vmatprep.subr.bf16.mxu0 0
    %1088 = vmatpush1.bf16.msra.mxu0 0
    %1089 = vmatprep.subr.bf16.mxu0 0
    %1090 = vmatpush1.bf16.msra.mxu0 0
    %1091 = vmatprep.subr.bf16.mxu0 0
    %1092 = vmatpush1.bf16.msra.mxu0 0
    %1093 = vmatprep.mubr.bf16.mxu0 0
    %1094 = vmatmul.mubr.bf16.gmra.mrb[0].mxu0 %v1056
    %v1095 = vpop.f32.mrb[0].mxu0
    %v1096 = vadd.f32 %v1028, %v1095
    %v1097 = vpop.f32.mrb[0].mxu0
    %v1098 = vpop.f32.mrb[0].mxu0
    %v1099 = vadd.f32 %v1033, %v1098
    %v1100 = vpop.f32.mrb[0].mxu0
    %1101 = vmatprep.mubr.bf16.mxu0 0
    %1102 = vmatmul.mubr.bf16.gmra.mrb[0].mxu0 %v1059
    %v1103 = vpop.f32.mrb[0].mxu0
    %v1104 = vadd.f32 %v1038, %v1103
    %v1105 = vpop.f32.mrb[0].mxu0
    %v1106 = vpop.f32.mrb[0].mxu0
    %v1107 = vadd.f32 %v1043, %v1106
    %v1108 = vpop.f32.mrb[0].mxu0
    %1109 = vdwg.mxu0
    %v1110 = vmul.f32 %v1096, 0.5
    %v1111 = vmul.f32 %v1099, 0.5
    %vm1112 = vcmp.lt.f32.partialorder %v1110, 0.0
    %vm1113 = vcmp.lt.f32.partialorder %v1111, 0.0
    %v1114 = vsel %vm1112, -1.0, 1.0
    %v1115 = vsel %vm1113, -1.0, 1.0
    %v1116 = vand.u32 2147483647, %v1110
    %v1117 = vand.u32 2147483647, %v1111
    %vm1118 = vcmp.gt.f32.partialorder %v1116, 2.4142137
    %vm1119 = vcmp.gt.f32.partialorder %v1117, 2.4142137
    %vm1120 = vcmp.gt.f32.partialorder %v1116, 0.41421357
    %vm1121 = vcmp.gt.f32.partialorder %v1117, 0.41421357
    %vm1122 = vmxor %vm1118, 1
    %vm1123 = vmxor %vm1119, 1
    %vm1124 = vmand %vm1120, %vm1122
    %vm1125 = vmand %vm1121, %vm1123
    %v1126 = vsel %vm1118, %v1116, 1.0
    %v1127 = vsel %vm1119, %v1117, 1.0
    %v1128 = vrcp.pop %v1126
    %v1129 = vrcp.pop %v1127
    %v1130 = vadd.f32 %v1116, 1.0
    %v1131 = vadd.f32 %v1117, 1.0
    %v1132 = vrcp.pop %v1130
    %v1133 = vrcp.pop %v1131
    %v1134 = vsub.f32 0.0, %v1128
    %v1135 = vsub.f32 0.0, %v1129
    %v1136 = vsub.f32 %v1116, 1.0
    %v1137 = vsub.f32 %v1117, 1.0
    %v1138 = vmul.f32 %v1136, %v1132
    %v1139 = vmul.f32 %v1137, %v1133
    %v1140 = vsel %vm1124, %v1138, %v1116
    %v1141 = vsel %vm1125, %v1139, %v1117
    %v1142 = vsel %vm1118, %v1134, %v1140
    %v1143 = vsel %vm1119, %v1135, %v1141
    %v1144 = vsel %vm1124, 0.7853982, 0.0
    %v1145 = vsel %vm1125, 0.7853982, 0.0
    %v1146 = vsel %vm1118, 1.5707964, %v1144
    %v1147 = vsel %vm1119, 1.5707964, %v1145
    %v1148 = vmul.f32 %v1142, %v1142
    %v1149 = vmul.f32 %v1143, %v1143
    %v1150 = vmul.f32 %v1148, 0.080537446
    %v1151 = vmul.f32 %v1149, 0.080537446
    %v1152 = vsub.f32 %v1150, 0.13877685
    %v1153 = vsub.f32 %v1151, 0.13877685
    %v1154 = vmul.f32 %v1152, %v1148
    %v1155 = vmul.f32 %v1153, %v1149
    %v1156 = vadd.f32 %v1154, 0.19977711
    %v1157 = vadd.f32 %v1155, 0.19977711
    %v1158 = vmul.f32 %v1156, %v1148
    %v1159 = vmul.f32 %v1157, %v1149
    %v1160 = vsub.f32 %v1158, 0.3333295
    %v1161 = vsub.f32 %v1159, 0.3333295
    %v1162 = vmul.f32 %v1160, %v1148
    %v1163 = vmul.f32 %v1161, %v1149
    %v1164 = vmul.f32 %v1162, %v1142
    %v1165 = vmul.f32 %v1163, %v1143
    %v1166 = vadd.f32 %v1164, %v1142
    %v1167 = vadd.f32 %v1165, %v1143
    %v1168 = vadd.f32 %v1146, %v1166
    %v1169 = vadd.f32 %v1147, %v1167
    %v1170 = vmul.f32 %v1114, %v1168
    %v1171 = vmul.f32 %v1115, %v1169
    %v1172 = vmul.f32 %v1170, 1.272
    %v1173 = vmul.f32 %v1171, 1.272
    %v1174 = vmul.f32 %v1172, 1.442695
    %v1175 = vpow.pop %v1174
    %v1176 = vmul.f32 %v1173, 1.442695
    %v1177 = vpow.pop %v1176
    %v1178 = vmul.f32 %v1175, %v800
    %v1179 = vmul.f32 %v1177, %v801
    %v1180 = vadd.f32 %v1178, %v1104
    %v1181 = vadd.f32 %v1179, %v1107
    %v1182 = vsel %vm421, %v1172, 0.0
    %v1183 = vsel %vm421, %v1173, 0.0
    %v1184 = vadd.f32 %v1182, %v1183
    %v1185 = vrot.slane %v1184, 4
    %v1186 = vadd.f32 %v1184, %v1185
    %v1187 = vrot.slane %v1186, 2
    %v1188 = vadd.f32 %v1186, %v1187
    %v1189 = vrot.slane %v1188, 1
    %v1190 = vadd.f32 %v1188, %v1189
    %v1191 = vadd.f32 %v811, %v1190
    %s1192 = scalar_lea.vmem [#allocation2], 144
    %v1193 = vld [vmem:[%s1192] sm:$0xf]
    %v1194 = vld [vmem:[%s1192 + $0x4] sm:$0xf]
    %v1195 = vld [vmem:[%s1192 + $0x8] sm:$0xf]
    %v1196 = vld [vmem:[%s1192 + $0xc] sm:$0xf]
    %v1197 = vpack.c.bf16 %v1181, %v1180
    %s1198 = scalar_lea.vmem [#allocation5], 288
    %v1199 = vld [vmem:[%s1198] sm:$0xff]
    %v1200 = vld [vmem:[%s1198 + $0x8] sm:$0xff]
    %v1201 = vld [vmem:[%s1198 + $0x10] sm:$0xff]
    %v1202 = vld [vmem:[%s1198 + $0x18] sm:$0xff]
    %1204 = vset.pattern.permute.xlu0 0
    %1205 = vperm.xlu0 %1204, %v1199
    %v1206 = vpop.permute.xlu0 %1205
    %1209 = vset.pattern.permute.xlu0 0
    %1210 = vperm.xlu0 %1209, %v1200
    %v1211 = vpop.permute.xlu0 %1210
    %1214 = vset.pattern.permute.xlu0 0
    %1215 = vperm.xlu0 %1214, %v1201
    %v1216 = vpop.permute.xlu0 %1215
    %1219 = vset.pattern.permute.xlu0 0
    %1220 = vperm.xlu0 %1219, %v1202
    %v1221 = vpop.permute.xlu0 %1220
    %v1227 = vunpack.c.l.b16 %v1193
    %v1228 = vunpack.c.l.b16 %v1194
    %v1229 = vunpack.c.l.b16 %v1195
    %v1230 = vunpack.c.l.b16 %v1196
    %v1231 = vpack.c.b16 %v1228, %v1227
    %v1232 = vpack.c.b16 %v1230, %v1229
    %v1234 = vsel %vm90, %v1231, 0
    %v1237 = vsel %vm90, %v1232, 0
    %1239 = vmatprep.subr.bf16.mxu0 0
    %1240 = vmatpush1.bf16.msra.mxu0 %v1197
    %1241 = vmatprep.subr.bf16.mxu0 0
    %1242 = vmatpush1.bf16.msra.mxu0 0
    %1243 = vmatprep.subr.bf16.mxu0 0
    %1244 = vmatpush1.bf16.msra.mxu0 0
    %1245 = vmatprep.subr.bf16.mxu0 0
    %1246 = vmatpush1.bf16.msra.mxu0 0
    %1247 = vmatprep.subr.bf16.mxu0 0
    %1248 = vmatpush1.bf16.msra.mxu0 0
    %1249 = vmatprep.subr.bf16.mxu0 0
    %1250 = vmatpush1.bf16.msra.mxu0 0
    %1251 = vmatprep.subr.bf16.mxu0 0
    %1252 = vmatpush1.bf16.msra.mxu0 0
    %1253 = vmatprep.subr.bf16.mxu0 0
    %1254 = vmatpush1.bf16.msra.mxu0 0
    %1255 = vmatprep.subr.bf16.mxu0 0
    %1256 = vmatpush1.bf16.msra.mxu0 0
    %1257 = vmatprep.subr.bf16.mxu0 0
    %1258 = vmatpush1.bf16.msra.mxu0 0
    %1259 = vmatprep.subr.bf16.mxu0 0
    %1260 = vmatpush1.bf16.msra.mxu0 0
    %1261 = vmatprep.subr.bf16.mxu0 0
    %1262 = vmatpush1.bf16.msra.mxu0 0
    %1263 = vmatprep.subr.bf16.mxu0 0
    %1264 = vmatpush1.bf16.msra.mxu0 0
    %1265 = vmatprep.subr.bf16.mxu0 0
    %1266 = vmatpush1.bf16.msra.mxu0 0
    %1267 = vmatprep.subr.bf16.mxu0 0
    %1268 = vmatpush1.bf16.msra.mxu0 0
    %1269 = vmatprep.subr.bf16.mxu0 0
    %1270 = vmatpush1.bf16.msra.mxu0 0
    %1271 = vmatprep.mubr.bf16.mxu0 0
    %1272 = vmatmul.mubr.bf16.gmra.mrb[0].mxu0 %v1234
    %v1273 = vpop.f32.mrb[0].mxu0
    %v1274 = vadd.f32 %v1206, %v1273
    %v1275 = vpop.f32.mrb[0].mxu0
    %v1276 = vpop.f32.mrb[0].mxu0
    %v1277 = vadd.f32 %v1211, %v1276
    %v1278 = vpop.f32.mrb[0].mxu0
    %1279 = vmatprep.mubr.bf16.mxu0 0
    %1280 = vmatmul.mubr.bf16.gmra.mrb[0].mxu0 %v1237
    %v1281 = vpop.f32.mrb[0].mxu0
    %v1282 = vadd.f32 %v1216, %v1281
    %v1283 = vpop.f32.mrb[0].mxu0
    %v1284 = vpop.f32.mrb[0].mxu0
    %v1285 = vadd.f32 %v1221, %v1284
    %v1286 = vpop.f32.mrb[0].mxu0
    %1287 = vdwg.mxu0
    %v1288 = vmax.f32 %v1274, 0.0
    %v1289 = vmax.f32 %v1277, 0.0
    %v1290 = vmax.f32 %v1282, 0.0
    %v1291 = vmax.f32 %v1285, 0.0
    %s1292 = scalar_lea.vmem [#allocation2], 160
    %v1293 = vld [vmem:[%s1292] sm:$0xf]
    %v1294 = vld [vmem:[%s1292 + $0x4] sm:$0xf]
    %v1295 = vld [vmem:[%s1292 + $0x8] sm:$0xf]
    %v1296 = vld [vmem:[%s1292 + $0xc] sm:$0xf]
    %v1297 = vpack.c.bf16 %v1289, %v1288
    %v1298 = vpack.c.bf16 %v1291, %v1290
    %s1299 = scalar_lea.vmem [#allocation5], 320
    %v1300 = vld [vmem:[%s1299] sm:$0xff]
    %v1301 = vld [vmem:[%s1299 + $0x8] sm:$0xff]
    %v1302 = vld [vmem:[%s1299 + $0x10] sm:$0xff]
    %v1303 = vld [vmem:[%s1299 + $0x18] sm:$0xff]
    %1305 = vset.pattern.permute.xlu0 0
    %1306 = vperm.xlu0 %1305, %v1300
    %v1307 = vpop.permute.xlu0 %1306
    %1310 = vset.pattern.permute.xlu0 0
    %1311 = vperm.xlu0 %1310, %v1301
    %v1312 = vpop.permute.xlu0 %1311
    %1315 = vset.pattern.permute.xlu0 0
    %1316 = vperm.xlu0 %1315, %v1302
    %v1317 = vpop.permute.xlu0 %1316
    %1320 = vset.pattern.permute.xlu0 0
    %1321 = vperm.xlu0 %1320, %v1303
    %v1322 = vpop.permute.xlu0 %1321
    %v1328 = vunpack.c.l.b16 %v1293
    %v1329 = vunpack.c.l.b16 %v1294
    %v1330 = vunpack.c.l.b16 %v1295
    %v1331 = vunpack.c.l.b16 %v1296
    %v1332 = vpack.c.b16 %v1329, %v1328
    %v1333 = vpack.c.b16 %v1331, %v1330
    %v1335 = vsel %vm192, %v1332, 0
    %v1338 = vsel %vm192, %v1333, 0
    %1340 = vmatprep.subr.bf16.mxu0 0
    %1341 = vmatpush1.bf16.msra.mxu0 %v1297
    %1342 = vmatprep.subr.bf16.mxu0 0
    %1343 = vmatpush1.bf16.msra.mxu0 %v1298
    %1344 = vmatprep.subr.bf16.mxu0 0
    %1345 = vmatpush1.bf16.msra.mxu0 0
    %1346 = vmatprep.subr.bf16.mxu0 0
    %1347 = vmatpush1.bf16.msra.mxu0 0
    %1348 = vmatprep.subr.bf16.mxu0 0
    %1349 = vmatpush1.bf16.msra.mxu0 0
    %1350 = vmatprep.subr.bf16.mxu0 0
    %1351 = vmatpush1.bf16.msra.mxu0 0
    %1352 = vmatprep.subr.bf16.mxu0 0
    %1353 = vmatpush1.bf16.msra.mxu0 0
    %1354 = vmatprep.subr.bf16.mxu0 0
    %1355 = vmatpush1.bf16.msra.mxu0 0
    %1356 = vmatprep.subr.bf16.mxu0 0
    %1357 = vmatpush1.bf16.msra.mxu0 0
    %1358 = vmatprep.subr.bf16.mxu0 0
    %1359 = vmatpush1.bf16.msra.mxu0 0
    %1360 = vmatprep.subr.bf16.mxu0 0
    %1361 = vmatpush1.bf16.msra.mxu0 0
    %1362 = vmatprep.subr.bf16.mxu0 0
    %1363 = vmatpush1.bf16.msra.mxu0 0
    %1364 = vmatprep.subr.bf16.mxu0 0
    %1365 = vmatpush1.bf16.msra.mxu0 0
    %1366 = vmatprep.subr.bf16.mxu0 0
    %1367 = vmatpush1.bf16.msra.mxu0 0
    %1368 = vmatprep.subr.bf16.mxu0 0
    %1369 = vmatpush1.bf16.msra.mxu0 0
    %1370 = vmatprep.subr.bf16.mxu0 0
    %1371 = vmatpush1.bf16.msra.mxu0 0
    %1372 = vmatprep.mubr.bf16.mxu0 0
    %1373 = vmatmul.mubr.bf16.gmra.mrb[0].mxu0 %v1335
    %v1374 = vpop.f32.mrb[0].mxu0
    %v1375 = vadd.f32 %v1307, %v1374
    %v1376 = vpop.f32.mrb[0].mxu0
    %v1377 = vpop.f32.mrb[0].mxu0
    %v1378 = vadd.f32 %v1312, %v1377
    %v1379 = vpop.f32.mrb[0].mxu0
    %1380 = vmatprep.mubr.bf16.mxu0 0
    %1381 = vmatmul.mubr.bf16.gmra.mrb[0].mxu0 %v1338
    %v1382 = vpop.f32.mrb[0].mxu0
    %v1383 = vadd.f32 %v1317, %v1382
    %v1384 = vpop.f32.mrb[0].mxu0
    %v1385 = vpop.f32.mrb[0].mxu0
    %v1386 = vadd.f32 %v1322, %v1385
    %v1387 = vpop.f32.mrb[0].mxu0
    %1388 = vdwg.mxu0
    %v1389 = vmax.f32 %v1375, 0.0
    %v1390 = vmax.f32 %v1378, 0.0
    %v1391 = vmax.f32 %v1383, 0.0
    %v1392 = vmax.f32 %v1386, 0.0
    %s1393 = scalar_lea.vmem [#allocation2], 176
    %v1394 = vld [vmem:[%s1393] sm:$0xf]
    %v1395 = vld [vmem:[%s1393 + $0x4] sm:$0xf]
    %v1396 = vld [vmem:[%s1393 + $0x8] sm:$0xf]
    %v1397 = vld [vmem:[%s1393 + $0xc] sm:$0xf]
    %v1398 = vpack.c.bf16 %v1390, %v1389
    %v1399 = vpack.c.bf16 %v1392, %v1391
    %s1400 = scalar_lea.vmem [#allocation5], 352
    %v1401 = vld [vmem:[%s1400] sm:$0xff]
    %v1402 = vld [vmem:[%s1400 + $0x8] sm:$0xff]
    %v1403 = vld [vmem:[%s1400 + $0x10] sm:$0xff]
    %v1404 = vld [vmem:[%s1400 + $0x18] sm:$0xff]
    %1406 = vset.pattern.permute.xlu0 0
    %1407 = vperm.xlu0 %1406, %v1401
    %v1408 = vpop.permute.xlu0 %1407
    %1411 = vset.pattern.permute.xlu0 0
    %1412 = vperm.xlu0 %1411, %v1402
    %v1413 = vpop.permute.xlu0 %1412
    %1416 = vset.pattern.permute.xlu0 0
    %1417 = vperm.xlu0 %1416, %v1403
    %v1418 = vpop.permute.xlu0 %1417
    %1421 = vset.pattern.permute.xlu0 0
    %1422 = vperm.xlu0 %1421, %v1404
    %v1423 = vpop.permute.xlu0 %1422
    %v1429 = vunpack.c.l.b16 %v1394
    %v1430 = vunpack.c.l.b16 %v1395
    %v1431 = vunpack.c.l.b16 %v1396
    %v1432 = vunpack.c.l.b16 %v1397
    %v1433 = vpack.c.b16 %v1430, %v1429
    %v1434 = vpack.c.b16 %v1432, %v1431
    %v1436 = vsel %vm192, %v1433, 0
    %v1439 = vsel %vm192, %v1434, 0
    %1441 = vmatprep.subr.bf16.mxu0 0
    %1442 = vmatpush1.bf16.msra.mxu0 %v1398
    %1443 = vmatprep.subr.bf16.mxu0 0
    %1444 = vmatpush1.bf16.msra.mxu0 %v1399
    %1445 = vmatprep.subr.bf16.mxu0 0
    %1446 = vmatpush1.bf16.msra.mxu0 0
    %1447 = vmatprep.subr.bf16.mxu0 0
    %1448 = vmatpush1.bf16.msra.mxu0 0
    %1449 = vmatprep.subr.bf16.mxu0 0
    %1450 = vmatpush1.bf16.msra.mxu0 0
    %1451 = vmatprep.subr.bf16.mxu0 0
    %1452 = vmatpush1.bf16.msra.mxu0 0
    %1453 = vmatprep.subr.bf16.mxu0 0
    %1454 = vmatpush1.bf16.msra.mxu0 0
    %1455 = vmatprep.subr.bf16.mxu0 0
    %1456 = vmatpush1.bf16.msra.mxu0 0
    %1457 = vmatprep.subr.bf16.mxu0 0
    %1458 = vmatpush1.bf16.msra.mxu0 0
    %1459 = vmatprep.subr.bf16.mxu0 0
    %1460 = vmatpush1.bf16.msra.mxu0 0
    %1461 = vmatprep.subr.bf16.mxu0 0
    %1462 = vmatpush1.bf16.msra.mxu0 0
    %1463 = vmatprep.subr.bf16.mxu0 0
    %1464 = vmatpush1.bf16.msra.mxu0 0
    %1465 = vmatprep.subr.bf16.mxu0 0
    %1466 = vmatpush1.bf16.msra.mxu0 0
    %1467 = vmatprep.subr.bf16.mxu0 0
    %1468 = vmatpush1.bf16.msra.mxu0 0
    %1469 = vmatprep.subr.bf16.mxu0 0
    %1470 = vmatpush1.bf16.msra.mxu0 0
    %1471 = vmatprep.subr.bf16.mxu0 0
    %1472 = vmatpush1.bf16.msra.mxu0 0
    %1473 = vmatprep.mubr.bf16.mxu0 0
    %1474 = vmatmul.mubr.bf16.gmra.mrb[0].mxu0 %v1436
    %v1475 = vpop.f32.mrb[0].mxu0
    %v1476 = vadd.f32 %v1408, %v1475
    %v1477 = vpop.f32.mrb[0].mxu0
    %v1478 = vpop.f32.mrb[0].mxu0
    %v1479 = vadd.f32 %v1413, %v1478
    %v1480 = vpop.f32.mrb[0].mxu0
    %1481 = vmatprep.mubr.bf16.mxu0 0
    %1482 = vmatmul.mubr.bf16.gmra.mrb[0].mxu0 %v1439
    %v1483 = vpop.f32.mrb[0].mxu0
    %v1484 = vadd.f32 %v1418, %v1483
    %v1485 = vpop.f32.mrb[0].mxu0
    %v1486 = vpop.f32.mrb[0].mxu0
    %v1487 = vadd.f32 %v1423, %v1486
    %v1488 = vpop.f32.mrb[0].mxu0
    %1489 = vdwg.mxu0
    %v1490 = vmul.f32 %v1476, 0.5
    %v1491 = vmul.f32 %v1479, 0.5
    %vm1492 = vcmp.lt.f32.partialorder %v1490, 0.0
    %vm1493 = vcmp.lt.f32.partialorder %v1491, 0.0
    %v1494 = vsel %vm1492, -1.0, 1.0
    %v1495 = vsel %vm1493, -1.0, 1.0
    %v1496 = vand.u32 2147483647, %v1490
    %v1497 = vand.u32 2147483647, %v1491
    %vm1498 = vcmp.gt.f32.partialorder %v1496, 2.4142137
    %vm1499 = vcmp.gt.f32.partialorder %v1497, 2.4142137
    %vm1500 = vcmp.gt.f32.partialorder %v1496, 0.41421357
    %vm1501 = vcmp.gt.f32.partialorder %v1497, 0.41421357
    %vm1502 = vmxor %vm1498, 1
    %vm1503 = vmxor %vm1499, 1
    %vm1504 = vmand %vm1500, %vm1502
    %vm1505 = vmand %vm1501, %vm1503
    %v1506 = vsel %vm1498, %v1496, 1.0
    %v1507 = vsel %vm1499, %v1497, 1.0
    %v1508 = vrcp.pop %v1506
    %v1509 = vrcp.pop %v1507
    %v1510 = vadd.f32 %v1496, 1.0
    %v1511 = vadd.f32 %v1497, 1.0
    %v1512 = vrcp.pop %v1510
    %v1513 = vrcp.pop %v1511
    %v1514 = vsub.f32 0.0, %v1508
    %v1515 = vsub.f32 0.0, %v1509
    %v1516 = vsub.f32 %v1496, 1.0
    %v1517 = vsub.f32 %v1497, 1.0
    %v1518 = vmul.f32 %v1516, %v1512
    %v1519 = vmul.f32 %v1517, %v1513
    %v1520 = vsel %vm1504, %v1518, %v1496
    %v1521 = vsel %vm1505, %v1519, %v1497
    %v1522 = vsel %vm1498, %v1514, %v1520
    %v1523 = vsel %vm1499, %v1515, %v1521
    %v1524 = vsel %vm1504, 0.7853982, 0.0
    %v1525 = vsel %vm1505, 0.7853982, 0.0
    %v1526 = vsel %vm1498, 1.5707964, %v1524
    %v1527 = vsel %vm1499, 1.5707964, %v1525
    %v1528 = vmul.f32 %v1522, %v1522
    %v1529 = vmul.f32 %v1523, %v1523
    %v1530 = vmul.f32 %v1528, 0.080537446
    %v1531 = vmul.f32 %v1529, 0.080537446
    %v1532 = vsub.f32 %v1530, 0.13877685
    %v1533 = vsub.f32 %v1531, 0.13877685
    %v1534 = vmul.f32 %v1532, %v1528
    %v1535 = vmul.f32 %v1533, %v1529
    %v1536 = vadd.f32 %v1534, 0.19977711
    %v1537 = vadd.f32 %v1535, 0.19977711
    %v1538 = vmul.f32 %v1536, %v1528
    %v1539 = vmul.f32 %v1537, %v1529
    %v1540 = vsub.f32 %v1538, 0.3333295
    %v1541 = vsub.f32 %v1539, 0.3333295
    %v1542 = vmul.f32 %v1540, %v1528
    %v1543 = vmul.f32 %v1541, %v1529
    %v1544 = vmul.f32 %v1542, %v1522
    %v1545 = vmul.f32 %v1543, %v1523
    %v1546 = vadd.f32 %v1544, %v1522
    %v1547 = vadd.f32 %v1545, %v1523
    %v1548 = vadd.f32 %v1526, %v1546
    %v1549 = vadd.f32 %v1527, %v1547
    %v1550 = vmul.f32 %v1494, %v1548
    %v1551 = vmul.f32 %v1495, %v1549
    %v1552 = vmul.f32 %v1550, 1.272
    %v1553 = vmul.f32 %v1551, 1.272
    %v1554 = vmul.f32 %v1552, 1.442695
    %v1555 = vpow.pop %v1554
    %v1556 = vmul.f32 %v1553, 1.442695
    %v1557 = vpow.pop %v1556
    %v1558 = vmul.f32 %v1555, %v1180
    %v1559 = vmul.f32 %v1557, %v1181
    %v1560 = vadd.f32 %v1558, %v1484
    %v1561 = vadd.f32 %v1559, %v1487
    %v1562 = vsel %vm421, %v1552, 0.0
    %v1563 = vsel %vm421, %v1553, 0.0
    %v1564 = vadd.f32 %v1562, %v1563
    %v1565 = vrot.slane %v1564, 4
    %v1566 = vadd.f32 %v1564, %v1565
    %v1567 = vrot.slane %v1566, 2
    %v1568 = vadd.f32 %v1566, %v1567
    %v1569 = vrot.slane %v1568, 1
    %v1570 = vadd.f32 %v1568, %v1569
    %v1571 = vadd.f32 %v1191, %v1570
    %v1572 = vld [vmem:[%s3] sm:$0xff]
    %v1573 = vld [vmem:[%s3 + $0x8] sm:$0xff]
    %v1575 = vsel %vm90, %v1572, 0
    %v1578 = vsel %vm90, %v1573, 0
    %1580 = vmatprep.subr.mxu0 0.0
    %1581 = vmatpush1.msra.mxu0 %v1560
    %1582 = vmatprep.subr.mxu0 0.0
    %1583 = vmatpush1.msra.mxu0 %v1561
    %1584 = vmatprep.subr.mxu0 0.0
    %1585 = vmatpush1.msra.mxu0 0.0
    %1586 = vmatprep.subr.mxu0 0.0
    %1587 = vmatpush1.msra.mxu0 0.0
    %1588 = vmatprep.subr.mxu0 0.0
    %1589 = vmatpush1.msra.mxu0 0.0
    %1590 = vmatprep.subr.mxu0 0.0
    %1591 = vmatpush1.msra.mxu0 0.0
    %1592 = vmatprep.subr.mxu0 0.0
    %1593 = vmatpush1.msra.mxu0 0.0
    %1594 = vmatprep.subr.mxu0 0.0
    %1595 = vmatpush1.msra.mxu0 0.0
    %1596 = vmatprep.subr.mxu0 0.0
    %1597 = vmatpush1.msra.mxu0 0.0
    %1598 = vmatprep.subr.mxu0 0.0
    %1599 = vmatpush1.msra.mxu0 0.0
    %1600 = vmatprep.subr.mxu0 0.0
    %1601 = vmatpush1.msra.mxu0 0.0
    %1602 = vmatprep.subr.mxu0 0.0
    %1603 = vmatpush1.msra.mxu0 0.0
    %1604 = vmatprep.subr.mxu0 0.0
    %1605 = vmatpush1.msra.mxu0 0.0
    %1606 = vmatprep.subr.mxu0 0.0
    %1607 = vmatpush1.msra.mxu0 0.0
    %1608 = vmatprep.subr.mxu0 0.0
    %1609 = vmatpush1.msra.mxu0 0.0
    %1610 = vmatprep.subr.mxu0 0.0
    %1611 = vmatpush1.msra.mxu0 0.0
    %1612 = vmatprep.subr.mxu0 0.0
    %1613 = vmatpush1.msra.mxu0 0.0
    %1614 = vmatprep.subr.mxu0 0.0
    %1615 = vmatpush1.msra.mxu0 0.0
    %1616 = vmatprep.subr.mxu0 0.0
    %1617 = vmatpush1.msra.mxu0 0.0
    %1618 = vmatprep.subr.mxu0 0.0
    %1619 = vmatpush1.msra.mxu0 0.0
    %1620 = vmatprep.subr.mxu0 0.0
    %1621 = vmatpush1.msra.mxu0 0.0
    %1622 = vmatprep.subr.mxu0 0.0
    %1623 = vmatpush1.msra.mxu0 0.0
    %1624 = vmatprep.subr.mxu0 0.0
    %1625 = vmatpush1.msra.mxu0 0.0
    %1626 = vmatprep.subr.mxu0 0.0
    %1627 = vmatpush1.msra.mxu0 0.0
    %1628 = vmatprep.subr.mxu0 0.0
    %1629 = vmatpush1.msra.mxu0 0.0
    %1630 = vmatprep.subr.mxu0 0.0
    %1631 = vmatpush1.msra.mxu0 0.0
    %1632 = vmatprep.subr.mxu0 0.0
    %1633 = vmatpush1.msra.mxu0 0.0
    %1634 = vmatprep.subr.mxu0 0.0
    %1635 = vmatpush1.msra.mxu0 0.0
    %1636 = vmatprep.subr.mxu0 0.0
    %1637 = vmatpush1.msra.mxu0 0.0
    %1638 = vmatprep.subr.mxu0 0.0
    %1639 = vmatpush1.msra.mxu0 0.0
    %1640 = vmatprep.subr.mxu0 0.0
    %1641 = vmatpush1.msra.mxu0 0.0
    %1642 = vmatprep.subr.mxu0 0.0
    %1643 = vmatpush1.msra.mxu0 0.0
    %1644 = vmatprep.mubr.f32.mxu0 0.0
    %1645 = vmatmul.mubr.f32.gmra.mrb[0].mxu0 %v1575
    %v1646 = vpop.f32.mrb[0].mxu0
    %v1647 = vadd.f32 0.0, %v1646
    %v1648 = vpop.f32.mrb[0].mxu0
    %1649 = vmatprep.mubr.f32.mxu0 0.0
    %1650 = vmatmul.mubr.f32.gmra.mrb[0].mxu0 %v1578
    %v1651 = vpop.f32.mrb[0].mxu0
    %v1652 = vadd.f32 0.0, %v1651
    %v1653 = vpop.f32.mrb[0].mxu0
    %1654 = vdwg.mxu0
    %1655 = vst.msk [vmem:[%s4] sm:$0xff] %vm421, %v1647
    %1656 = vst.msk [vmem:[%s4 + $0x8] sm:$0xff] %vm421, %v1652
    %vm1657 = vcmask 57344
    %1658 = vst.msk [vmem:[#allocation7] sm:$0x1] %vm1657, %v1571
    // Predicated region
    $region26: #{_lambda_.1} parent=1 // pred_check
      _
    $region27: #{_lambda_.1} parent=1 // pred_check_branch
      %1660 = sbr.rel (0) target = $region29
    $region28: #{_lambda_.1} parent=1 // pred_region
      _
    $region29: #{_lambda_.1} parent=1 // pred_fallthru
      _
    // Predicated region
    $region30: #{_lambda_.1} parent=1 // pred_check
      _
    $region31: #{_lambda_.1} parent=1 // pred_check_branch
      %1662 = sbr.rel (0) target = $region33
    $region32: #{_lambda_.1} parent=1 // pred_region
      %s1664 = ssub.s32 16, 16
      %1665 = vsyncadd [#allocation4], %s1664
      %s1667 = sshll.u32 [#allocation7], 4
      %s1668 = int_to_ptr.vmem [resolvable:$true] %s1667
      %1670 = dma.vmem_to_hbm [thread:$0]  %s1668, 16, %s5, [#allocation4]
    $region33: #{_lambda_.1} parent=1 // pred_fallthru
      _
    // Predicated region
    $region34: #{_lambda_.1} parent=1 // pred_check
      _
    $region35: #{_lambda_.1} parent=1 // pred_check_branch
      %1672 = sbr.rel (0) target = $region37
    $region36: #{_lambda_.1} parent=1 // pred_region
      _
    $region37: #{_lambda_.1} parent=1 // pred_fallthru
      _
    // Predicated region
    $region38: #{_lambda_.1} parent=1 // pred_check
      _
    $region39: #{_lambda_.1} parent=1 // pred_check_branch
      %1674 = sbr.rel (0) target = $region41
    $region40: #{_lambda_.1} parent=1 // pred_region
      %1675 = dma.done [#allocation4], 16
    $region41: #{_lambda_.1} parent=1 // pred_fallthru
      _
    %1676 = vsyncpa [#allocation3], 1
    %1677 = vsyncpa [#allocation6], 1
    %1678 = vsyncpa [#allocation4], 1

</llo_original>
